<compile_context>
chip_gen: v7x
topology: tpu7x:2x2x1
jax: 0.10.0
libtpu: 0.0.40
codegen_flags: <defaults>
</compile_context>

<pallas_src>
import jax
import jax.numpy as jnp
from jax.experimental import pallas as pl
from jax.experimental.pallas import tpu as pltpu

HIDDEN = 512
IN_FEATURES = 2
N_BRANCHES = 4
FUSED = N_BRANCHES * HIDDEN  # 2048 lanes: [branch0 | branch1 | branch2 | branch3]


def _round_up(n, m):
    return (n + m - 1) // m * m


def minmax_kernel(x_ref, w1a_ref, w2a_ref, ba_ref, w1b_ref, w2b_ref, bb_ref, o_ref):
    # x tile: (TB, 2)
    x = x_ref[...].astype(jnp.float32)

    # ---- layer 1: Quadratic(2, 512) x 4 branches, fused along lanes, on MXU ----
    # Weights are pre-scaled by 0.5 so that z = 0.5 * z_original and
    # sigmoid(z_original) == 0.5 * tanh(z) + 0.5.
    z = (
        jnp.dot(x * x, w1a_ref[...], preferred_element_type=jnp.float32)
        + jnp.dot(x, w2a_ref[...], preferred_element_type=jnp.float32)
        + ba_ref[...]
    )  # (TB, 2048)

    # single EUP transcendental per element; the 0.5*s+0.5 affine is folded
    # into the (pre-packed) layer-2 weights and biases.
    s = jnp.tanh(z)

    # ---- layer 2: Quadratic(512, 1) per branch as lane-segment reductions ----
    # t = h^2*w1b + h*w2b with h = 0.5*s + 0.5 rewritten as
    # t = (0.25*w1b)*s^2 + 0.5*(w1b+w2b)*s + const   (const folded into bb)
    t = (s * s) * w1b_ref[...] + s * w2b_ref[...]  # (TB, 2048), pure VPU

    outs = []
    for j in range(N_BRANCHES):  # 4 static 512-lane segments (multiples of 128)
        seg = t[:, j * HIDDEN:(j + 1) * HIDDEN]
        outs.append(jnp.sum(seg, axis=-1, keepdims=True) + bb_ref[j])  # (TB, 1)

    o_ref[...] = jnp.maximum(
        jnp.minimum(outs[0], outs[1]), jnp.minimum(outs[2], outs[3])
    ).astype(o_ref.dtype)


def _pack_params(p):
    """Pack per-branch params lane-dense and fold the sigmoid affine in."""
    # Layer 1: pre-scale by 0.5 (sigmoid(z) = 0.5*tanh(0.5*z) + 0.5).
    w1a = 0.5 * jnp.transpose(p["w1a"], (1, 0, 2)).reshape(IN_FEATURES, FUSED)
    w2a = 0.5 * jnp.transpose(p["w2a"], (1, 0, 2)).reshape(IN_FEATURES, FUSED)
    ba = 0.5 * jnp.transpose(p["ba"], (1, 0, 2)).reshape(1, FUSED)

    # Layer 2: fold h = 0.5*s + 0.5 into the weights.
    w1b = p["w1b"].reshape(1, FUSED)  # (4,512,1) -> (1, 2048)
    w2b = p["w2b"].reshape(1, FUSED)
    w1b_f = 0.25 * w1b
    w2b_f = 0.5 * (w1b + w2b)
    const = 0.25 * w1b + 0.5 * w2b                     # (1, 2048)
    bb = p["bb"].reshape(N_BRANCHES)
    bb_f = bb + jnp.sum(const.reshape(N_BRANCHES, HIDDEN), axis=-1)  # (4,)
    return w1a, w2a, ba, w1b_f, w2b_f, bb_f


def _choose_tb(B, tb):
    # Cap TB so the (TB, 2048) f32 temporaries stay well inside scoped VMEM on
    # every generation (v7x physical VMEM is 64 MiB).
    tb = min(tb, 1024)
    b8 = _round_up(B, 8)
    TB = min(tb, b8)
    if b8 >= 16:
        # Guarantee >= 2 grid steps so the "parallel" batch axis can be
        # sharded across both v7x TensorCores.
        TB = min(TB, _round_up((b8 + 1) // 2, 8))
    return max(8, TB)


def minmaxnet2x2_forward(x, params, *, tb=512):
    B = x.shape[0]
    TB = _choose_tb(B, tb)              # sublane-aligned batch tile
    Bp = _round_up(B, TB)
    if Bp != B:
        x = jnp.pad(x, ((0, Bp - B), (0, 0)))

    w1a, w2a, ba, w1b, w2b, bb = _pack_params(params)

    const2 = lambda i: (0, 0)           # weights stay resident across batch tiles

    weight_bytes = 4 * (w1a.size + w2a.size + ba.size + w1b.size + w2b.size + bb.size)
    # VMEM budget: resident weights + double-buffered x/out tiles + ~6 live
    # (TB, 2048) f32 elementwise temporaries, with some slack.
    elem_bytes = 6 * TB * FUSED * 4
    io_bytes = 2 * 2 * TB * (IN_FEATURES + 1) * 4
    vmem_limit = int(min(max(32 << 20, weight_bytes + io_bytes + elem_bytes + (4 << 20)),
                         64 << 20))

    cost = pl.CostEstimate(
        flops=int(Bp * FUSED * 14),               # 2 skinny MXU matmuls + VPU layer 2
        transcendentals=int(Bp * FUSED),
        bytes_accessed=int(Bp * (IN_FEATURES + 1) * 4 + weight_bytes),
    )

    out = pl.pallas_call(
        minmax_kernel,
        out_shape=jax.ShapeDtypeStruct((Bp, 1), jnp.float32),
        grid=(Bp // TB,),
        in_specs=[
            pl.BlockSpec((TB, IN_FEATURES), lambda i: (i, 0)),
            pl.BlockSpec((IN_FEATURES, FUSED), const2),
            pl.BlockSpec((IN_FEATURES, FUSED), const2),
            pl.BlockSpec((1, FUSED), const2),
            pl.BlockSpec((1, FUSED), const2),
            pl.BlockSpec((1, FUSED), const2),
            pl.BlockSpec(memory_space=pltpu.MemorySpace.SMEM),  # folded layer-2 biases
        ],
        out_specs=pl.BlockSpec((TB, 1), lambda i: (i, 0)),
        compiler_params=pltpu.CompilerParams(
            dimension_semantics=("parallel",),
            vmem_limit_bytes=vmem_limit,
        ),
        cost_estimate=cost,
    )(x, w1a, w2a, ba, w1b, w2b, bb)
    return out[:B]


def init_params(key):
    """Deterministic init matching Quadratic.reset_parameters (all ~ N(0,1))."""
    ks = jax.random.split(key, 6)
    w1a = jax.random.normal(ks[0], (N_BRANCHES, IN_FEATURES, HIDDEN), jnp.float32)
    w2a = jax.random.normal(ks[1], (N_BRANCHES, IN_FEATURES, HIDDEN), jnp.float32)
    ba = jax.random.normal(ks[2], (N_BRANCHES, 1, HIDDEN), jnp.float32)
    w1b = jax.random.normal(ks[3], (N_BRANCHES, HIDDEN, 1), jnp.float32)
    w2b = jax.random.normal(ks[4], (N_BRANCHES, HIDDEN, 1), jnp.float32)
    bb = jax.random.normal(ks[5], (N_BRANCHES, 1, 1), jnp.float32)
    return dict(w1a=w1a, w2a=w2a, ba=ba, w1b=w1b, w2b=w2b, bb=bb)


def reference_forward(x, p):
    """Pure-JAX reference mirroring the PyTorch forward (per-branch params)."""
    outs = []
    for j in range(N_BRANCHES):
        h = (x * x) @ p["w1a"][j] + x @ p["w2a"][j] + p["ba"][j]
        h = jax.nn.sigmoid(h)
        o = (h * h) @ p["w1b"][j] + h @ p["w2b"][j] + p["bb"][j]
        outs.append(o)
    return jnp.maximum(jnp.minimum(outs[0], outs[1]), jnp.minimum(outs[2], outs[3]))


if __name__ == "__main__":
    key = jax.random.PRNGKey(0)
    k_param, k_x = jax.random.split(key)
    params = init_params(k_param)

    # small single-tile check (B=8)
    B = 8
    x = jax.random.normal(k_x, (B, IN_FEATURES), jnp.float32)
    out = jax.block_until_ready(minmaxnet2x2_forward(x, params))
    ref = reference_forward(x, params)
    assert out.shape == (B, 1)
    assert jnp.allclose(out, ref, atol=1e-3, rtol=1e-3), (out, ref)

    # multi-tile + padded-batch check (B=300 -> TB=152, grid of 2)
    x2 = jax.random.normal(jax.random.PRNGKey(1), (300, IN_FEATURES), jnp.float32)
    out2 = jax.block_until_ready(minmaxnet2x2_forward(x2, params))
    ref2 = reference_forward(x2, params)
    assert out2.shape == (300, 1)
    assert jnp.allclose(out2, ref2, atol=1e-3, rtol=1e-3)

    print("KERNEL_OK")
</pallas_src>

<mosaic_0001>
module attributes {stable_mosaic.version = 11 : i64} {
  func.func @minmax_kernel(%arg0: i32, %arg1: memref<8x2xf32, #tpu.memory_space<vmem>>, %arg2: memref<2x2048xf32, #tpu.memory_space<vmem>>, %arg3: memref<2x2048xf32, #tpu.memory_space<vmem>>, %arg4: memref<1x2048xf32, #tpu.memory_space<vmem>>, %arg5: memref<1x2048xf32, #tpu.memory_space<vmem>>, %arg6: memref<1x2048xf32, #tpu.memory_space<vmem>>, %arg7: memref<4xf32, #tpu.memory_space<smem>>, %arg8: memref<8x1xf32, #tpu.memory_space<vmem>>) attributes {dimension_semantics = [#tpu.dimension_semantics<parallel>], iteration_bounds = array<i64: 1>, scalar_prefetch = 0 : i64, scratch_operands = 0 : i64, tpu.core_type = #tpu.core_type<tc>, window_params = [{transform_indices = @transform_0, window_bounds = array<i64: 8, 2>}, {pipeline_mode = #tpu.pipeline_mode<synchronous>, transform_indices = @transform_1, window_bounds = array<i64: 2, 2048>}, {pipeline_mode = #tpu.pipeline_mode<synchronous>, transform_indices = @transform_2, window_bounds = array<i64: 2, 2048>}, {pipeline_mode = #tpu.pipeline_mode<synchronous>, transform_indices = @transform_3, window_bounds = array<i64: 1, 2048>}, {pipeline_mode = #tpu.pipeline_mode<synchronous>, transform_indices = @transform_4, window_bounds = array<i64: 1, 2048>}, {pipeline_mode = #tpu.pipeline_mode<synchronous>, transform_indices = @transform_5, window_bounds = array<i64: 1, 2048>}, {transform_indices = @transform_6, window_bounds = array<i64: 4>}, {transform_indices = @transform_7, window_bounds = array<i64: 8, 1>}]} {
    %c0 = arith.constant 0 : index
    %c0_0 = arith.constant 0 : index
    %0 = vector.load %arg1[%c0, %c0_0] : memref<8x2xf32, #tpu.memory_space<vmem>>, vector<8x2xf32>
    %1 = arith.mulf %0, %0 : vector<8x2xf32>
    %c0_1 = arith.constant 0 : index
    %c0_2 = arith.constant 0 : index
    %2 = vector.load %arg2[%c0_1, %c0_2] : memref<2x2048xf32, #tpu.memory_space<vmem>>, vector<2x2048xf32>
    %cst = arith.constant dense<0.000000e+00> : vector<8x2048xf32>
    %3 = tpu.matmul %1, %2, %cst {dimension_numbers = #tpu.dot_dimension_numbers<[1], [0], [0], [1], [0, 0, 1, 1], [], []>} : vector<8x2xf32>, vector<2x2048xf32>, vector<8x2048xf32> -> vector<8x2048xf32>
    %c0_3 = arith.constant 0 : index
    %c0_4 = arith.constant 0 : index
    %4 = vector.load %arg3[%c0_3, %c0_4] : memref<2x2048xf32, #tpu.memory_space<vmem>>, vector<2x2048xf32>
    %cst_5 = arith.constant dense<0.000000e+00> : vector<8x2048xf32>
    %5 = tpu.matmul %0, %4, %cst_5 {dimension_numbers = #tpu.dot_dimension_numbers<[1], [0], [0], [1], [0, 0, 1, 1], [], []>} : vector<8x2xf32>, vector<2x2048xf32>, vector<8x2048xf32> -> vector<8x2048xf32>
    %6 = arith.addf %3, %5 : vector<8x2048xf32>
    %c0_6 = arith.constant 0 : index
    %c0_7 = arith.constant 0 : index
    %7 = vector.load %arg4[%c0_6, %c0_7] : memref<1x2048xf32, #tpu.memory_space<vmem>>, vector<1x2048xf32>
    %8 = vector.broadcast %7 : vector<1x2048xf32> to vector<8x2048xf32>
    %9 = arith.addf %6, %8 : vector<8x2048xf32>
    %10 = math.tanh %9 : vector<8x2048xf32>
    %11 = arith.mulf %10, %10 : vector<8x2048xf32>
    %c0_8 = arith.constant 0 : index
    %c0_9 = arith.constant 0 : index
    %12 = vector.load %arg5[%c0_8, %c0_9] : memref<1x2048xf32, #tpu.memory_space<vmem>>, vector<1x2048xf32>
    %13 = vector.broadcast %12 : vector<1x2048xf32> to vector<8x2048xf32>
    %14 = arith.mulf %11, %13 : vector<8x2048xf32>
    %c0_10 = arith.constant 0 : index
    %c0_11 = arith.constant 0 : index
    %15 = vector.load %arg6[%c0_10, %c0_11] : memref<1x2048xf32, #tpu.memory_space<vmem>>, vector<1x2048xf32>
    %16 = vector.broadcast %15 : vector<1x2048xf32> to vector<8x2048xf32>
    %17 = arith.mulf %10, %16 : vector<8x2048xf32>
    %18 = arith.addf %14, %17 : vector<8x2048xf32>
    %19 = vector.extract_strided_slice %18 {offsets = [0, 0], sizes = [8, 512], strides = [1, 1]} : vector<8x2048xf32> to vector<8x512xf32>
    %cst_12 = arith.constant dense<0.000000e+00> : vector<8xf32>
    %20 = vector.multi_reduction <add>, %19, %cst_12 [1] : vector<8x512xf32> to vector<8xf32>
    %21 = vector.shape_cast %20 : vector<8xf32> to vector<8x1xf32>
    %c0_13 = arith.constant 0 : index
    %22 = memref.load %arg7[%c0_13] : memref<4xf32, #tpu.memory_space<smem>>
    %23 = vector.broadcast %22 : f32 to vector<8x1xf32>
    %24 = arith.addf %21, %23 : vector<8x1xf32>
    %25 = vector.extract_strided_slice %18 {offsets = [0, 512], sizes = [8, 512], strides = [1, 1]} : vector<8x2048xf32> to vector<8x512xf32>
    %cst_14 = arith.constant dense<0.000000e+00> : vector<8xf32>
    %26 = vector.multi_reduction <add>, %25, %cst_14 [1] : vector<8x512xf32> to vector<8xf32>
    %27 = vector.shape_cast %26 : vector<8xf32> to vector<8x1xf32>
    %c1 = arith.constant 1 : index
    %28 = memref.load %arg7[%c1] : memref<4xf32, #tpu.memory_space<smem>>
    %29 = vector.broadcast %28 : f32 to vector<8x1xf32>
    %30 = arith.addf %27, %29 : vector<8x1xf32>
    %31 = vector.extract_strided_slice %18 {offsets = [0, 1024], sizes = [8, 512], strides = [1, 1]} : vector<8x2048xf32> to vector<8x512xf32>
    %cst_15 = arith.constant dense<0.000000e+00> : vector<8xf32>
    %32 = vector.multi_reduction <add>, %31, %cst_15 [1] : vector<8x512xf32> to vector<8xf32>
    %33 = vector.shape_cast %32 : vector<8xf32> to vector<8x1xf32>
    %c2 = arith.constant 2 : index
    %34 = memref.load %arg7[%c2] : memref<4xf32, #tpu.memory_space<smem>>
    %35 = vector.broadcast %34 : f32 to vector<8x1xf32>
    %36 = arith.addf %33, %35 : vector<8x1xf32>
    %37 = vector.extract_strided_slice %18 {offsets = [0, 1536], sizes = [8, 512], strides = [1, 1]} : vector<8x2048xf32> to vector<8x512xf32>
    %cst_16 = arith.constant dense<0.000000e+00> : vector<8xf32>
    %38 = vector.multi_reduction <add>, %37, %cst_16 [1] : vector<8x512xf32> to vector<8xf32>
    %39 = vector.shape_cast %38 : vector<8xf32> to vector<8x1xf32>
    %c3 = arith.constant 3 : index
    %40 = memref.load %arg7[%c3] : memref<4xf32, #tpu.memory_space<smem>>
    %41 = vector.broadcast %40 : f32 to vector<8x1xf32>
    %42 = arith.addf %39, %41 : vector<8x1xf32>
    %43 = arith.minimumf %24, %30 : vector<8x1xf32>
    %44 = arith.minimumf %36, %42 : vector<8x1xf32>
    %45 = arith.maximumf %43, %44 : vector<8x1xf32>
    %c0_17 = arith.constant 0 : index
    %c0_18 = arith.constant 0 : index
    %46 = vector.load %arg8[%c0_17, %c0_18] : memref<8x1xf32, #tpu.memory_space<vmem>>, vector<8x1xf32>
    tpu.vector_store %arg8[%c0_17, %c0_18], %45 {strides = array<i32>} : memref<8x1xf32, #tpu.memory_space<vmem>>, vector<8x1xf32>,
    return
  }
  func.func @transform_0(%arg0: i32) -> (i32, i32) {
    %c0_i32 = arith.constant 0 : i32
    %c0_i32_0 = arith.constant 0 : i32
    return %arg0, %c0_i32 : i32, i32
  }
  func.func @transform_1(%arg0: i32) -> (i32, i32) {
    %c0_i32 = arith.constant 0 : i32
    %c0_i32_0 = arith.constant 0 : i32
    %c0_i32_1 = arith.constant 0 : i32
    return %c0_i32, %c0_i32_0 : i32, i32
  }
  func.func @transform_2(%arg0: i32) -> (i32, i32) {
    %c0_i32 = arith.constant 0 : i32
    %c0_i32_0 = arith.constant 0 : i32
    %c0_i32_1 = arith.constant 0 : i32
    return %c0_i32, %c0_i32_0 : i32, i32
  }
  func.func @transform_3(%arg0: i32) -> (i32, i32) {
    %c0_i32 = arith.constant 0 : i32
    %c0_i32_0 = arith.constant 0 : i32
    %c0_i32_1 = arith.constant 0 : i32
    return %c0_i32, %c0_i32_0 : i32, i32
  }
  func.func @transform_4(%arg0: i32) -> (i32, i32) {
    %c0_i32 = arith.constant 0 : i32
    %c0_i32_0 = arith.constant 0 : i32
    %c0_i32_1 = arith.constant 0 : i32
    return %c0_i32, %c0_i32_0 : i32, i32
  }
  func.func @transform_5(%arg0: i32) -> (i32, i32) {
    %c0_i32 = arith.constant 0 : i32
    %c0_i32_0 = arith.constant 0 : i32
    %c0_i32_1 = arith.constant 0 : i32
    return %c0_i32, %c0_i32_0 : i32, i32
  }
  func.func @transform_6(%arg0: i32) -> i32 {
    %c0_i32 = arith.constant 0 : i32
    %c0_i32_0 = arith.constant 0 : i32
    return %c0_i32 : i32
  }
  func.func @transform_7(%arg0: i32) -> (i32, i32) {
    %c0_i32 = arith.constant 0 : i32
    %c0_i32_0 = arith.constant 0 : i32
    return %arg0, %c0_i32 : i32, i32
  }
}

</mosaic_0001>

<llo_original>
// kernel: tpu_custom_call.1
$region0: #{tpu_custom_call.1}
  #allocation0 [shape = 'u32[]', space=smem, size = 0x4, offset = 0x4, fixed_abs, tag = 'smem constant byte address 0x4 - core index']
  #allocation1 [shape = 'u32[144,128]{1,0:T(1,128)}', space=vmem, size = 0x12000, scoped, tag = 'internal scratch']
  %s0 = inlined_call_operand.vmem [shape: f32[8,2], index: 0, kind: input, shape index: {}]
  %s1 = inlined_call_operand.hbm [shape: f32[2,2048], index: 1, kind: input, shape index: {}]
  %s2 = inlined_call_operand.hbm [shape: f32[2,2048], index: 2, kind: input, shape index: {}]
  %s3 = inlined_call_operand.vmem [shape: f32[1,2048], index: 3, kind: input, shape index: {}]
  %s4 = inlined_call_operand.hbm [shape: f32[1,2048], index: 4, kind: input, shape index: {}]
  %s5 = inlined_call_operand.hbm [shape: f32[1,2048], index: 5, kind: input, shape index: {}]
  %s6 = inlined_call_operand.vmem [shape: f32[4], index: 6, kind: input, shape index: {}]
  %s7 = inlined_call_operand.vmem [shape: f32[8,1], index: 7, kind: output, shape index: {}]
  %s8 = sld [smem:[#allocation0]]
  $region58: #{tpu_custom_call.1} parent=0
    _
  %s10 = ssub.s32 1, %s8
  %s11 = scalar_select 0, %s10, %s8
  $region1: #{tpu_custom_call.1} parent=0
    #allocation2 [shape = 'u8[16384]{0}', space=vmem, size = 0x4000, scoped, tag = 'input window, operand 1, single buffered']
    #allocation3 [shape = 's32[1]{0}', space=sflag, size = 0x4, scoped, tag = 'scoped memory for tpu_custom_call.1']
    #allocation4 [shape = 's32[1]{0}', space=sflag, size = 0x4, scoped, tag = 'scoped memory for tpu_custom_call.1']
    #allocation5 [shape = 'u8[16384]{0}', space=vmem, size = 0x4000, scoped, tag = 'input window, operand 2, single buffered']
    #allocation6 [shape = 's32[1]{0}', space=sflag, size = 0x4, scoped, tag = 'scoped memory for tpu_custom_call.1']
    #allocation7 [shape = 'u8[8192]{0}', space=vmem, size = 0x2000, scoped, tag = 'input window, operand 4, single buffered']
    #allocation8 [shape = 'u8[8192]{0}', space=vmem, size = 0x2000, scoped, tag = 'input window, operand 5, single buffered']
    #allocation9 [shape = 's32[1]{0}', space=sflag, size = 0x4, scoped, tag = 'scoped memory for tpu_custom_call.1']
    #allocation10 [shape = 'u8[512]{0}', space=smem, size = 0x200, scoped, tag = 'input window, operand 6, single buffered']
    %12 = vsyncpa [#allocation3], 0
    %13 = vsyncpa [#allocation6], 0
    %14 = vsyncpa [#allocation9], 0
    %15 = vsyncpa [#allocation4], 0
    // Predicated region
    $region2: #{tpu_custom_call.1} parent=1 // pred_check
      _
    $region3: #{tpu_custom_call.1} parent=1 // pred_check_branch
      %17 = sbr.rel (0) target = $region5
    $region4: #{tpu_custom_call.1} parent=1 // pred_region
      _
    $region5: #{tpu_custom_call.1} parent=1 // pred_fallthru
      _
    // Predicated region
    $region6: #{tpu_custom_call.1} parent=1 // pred_check
      _
    $region7: #{tpu_custom_call.1} parent=1 // pred_check_branch
      %19 = sbr.rel (0) target = $region9
    $region8: #{tpu_custom_call.1} parent=1 // pred_region
      %s21 = ssub.s32 512, 512
      %22 = vsyncadd [#allocation3], %s21
      %s24 = sshll.u32 [#allocation2], 4
      %s25 = int_to_ptr.vmem [resolvable:$true] %s24
      %27 = dma.hbm_to_vmem [thread:$0]  %s1, 512, %s25, [#allocation3]
    $region9: #{tpu_custom_call.1} parent=1 // pred_fallthru
      _
    // Predicated region
    $region10: #{tpu_custom_call.1} parent=1 // pred_check
      _
    $region11: #{tpu_custom_call.1} parent=1 // pred_check_branch
      %29 = sbr.rel (0) target = $region13
    $region12: #{tpu_custom_call.1} parent=1 // pred_region
      %s31 = ssub.s32 512, 512
      %32 = vsyncadd [#allocation6], %s31
      %s34 = sshll.u32 [#allocation5], 4
      %s35 = int_to_ptr.vmem [resolvable:$true] %s34
      %37 = dma.hbm_to_vmem [thread:$0]  %s2, 512, %s35, [#allocation6]
    $region13: #{tpu_custom_call.1} parent=1 // pred_fallthru
      _
    // Predicated region
    $region14: #{tpu_custom_call.1} parent=1 // pred_check
      _
    $region15: #{tpu_custom_call.1} parent=1 // pred_check_branch
      %39 = sbr.rel (0) target = $region17
    $region16: #{tpu_custom_call.1} parent=1 // pred_region
      _
    $region17: #{tpu_custom_call.1} parent=1 // pred_fallthru
      _
    // Predicated region
    $region18: #{tpu_custom_call.1} parent=1 // pred_check
      _
    $region19: #{tpu_custom_call.1} parent=1 // pred_check_branch
      %41 = sbr.rel (0) target = $region21
    $region20: #{tpu_custom_call.1} parent=1 // pred_region
      %s43 = ssub.s32 256, 256
      %44 = vsyncadd [#allocation6], %s43
      %s46 = sshll.u32 [#allocation7], 4
      %s47 = int_to_ptr.vmem [resolvable:$true] %s46
      %49 = dma.hbm_to_vmem [thread:$0]  %s4, 256, %s47, [#allocation6]
    $region21: #{tpu_custom_call.1} parent=1 // pred_fallthru
      _
    // Predicated region
    $region22: #{tpu_custom_call.1} parent=1 // pred_check
      _
    $region23: #{tpu_custom_call.1} parent=1 // pred_check_branch
      %51 = sbr.rel (0) target = $region25
    $region24: #{tpu_custom_call.1} parent=1 // pred_region
      %s53 = ssub.s32 256, 256
      %54 = vsyncadd [#allocation9], %s53
      %s56 = sshll.u32 [#allocation8], 4
      %s57 = int_to_ptr.vmem [resolvable:$true] %s56
      %59 = dma.hbm_to_vmem [thread:$0]  %s5, 256, %s57, [#allocation9]
    $region25: #{tpu_custom_call.1} parent=1 // pred_fallthru
      _
    // Predicated region
    $region26: #{tpu_custom_call.1} parent=1 // pred_check
      _
    $region27: #{tpu_custom_call.1} parent=1 // pred_check_branch
      %61 = sbr.rel (0) target = $region29
    $region28: #{tpu_custom_call.1} parent=1 // pred_region
      %s63 = ssub.s32 16, 16
      %64 = vsyncadd [#allocation4], %s63
      %s66 = sshll.u32 %s6, 4
      %s67 = int_to_ptr.vmem [resolvable:$true] %s66
      %69 = dma.vmem_to_smem %s67, 16, [#allocation10], [#allocation4]
    $region29: #{tpu_custom_call.1} parent=1 // pred_fallthru
      _
    // Predicated region
    $region30: #{tpu_custom_call.1} parent=1 // pred_check
      _
    $region31: #{tpu_custom_call.1} parent=1 // pred_check_branch
      %71 = sbr.rel (0) target = $region33
    $region32: #{tpu_custom_call.1} parent=1 // pred_region
      %72 = dma.done [#allocation3], 512
    $region33: #{tpu_custom_call.1} parent=1 // pred_fallthru
      _
    // Predicated region
    $region34: #{tpu_custom_call.1} parent=1 // pred_check
      _
    $region35: #{tpu_custom_call.1} parent=1 // pred_check_branch
      %74 = sbr.rel (0) target = $region37
    $region36: #{tpu_custom_call.1} parent=1 // pred_region
      %75 = dma.done [#allocation6], 512
    $region37: #{tpu_custom_call.1} parent=1 // pred_fallthru
      _
    // Predicated region
    $region38: #{tpu_custom_call.1} parent=1 // pred_check
      _
    $region39: #{tpu_custom_call.1} parent=1 // pred_check_branch
      %77 = sbr.rel (0) target = $region41
    $region40: #{tpu_custom_call.1} parent=1 // pred_region
      %78 = dma.done [#allocation6], 256
    $region41: #{tpu_custom_call.1} parent=1 // pred_fallthru
      _
    // Predicated region
    $region42: #{tpu_custom_call.1} parent=1 // pred_check
      _
    $region43: #{tpu_custom_call.1} parent=1 // pred_check_branch
      %80 = sbr.rel (0) target = $region45
    $region44: #{tpu_custom_call.1} parent=1 // pred_region
      %81 = dma.done [#allocation9], 256
    $region45: #{tpu_custom_call.1} parent=1 // pred_fallthru
      _
    // Predicated region
    $region46: #{tpu_custom_call.1} parent=1 // pred_check
      _
    $region47: #{tpu_custom_call.1} parent=1 // pred_check_branch
      %83 = sbr.rel (0) target = $region49
    $region48: #{tpu_custom_call.1} parent=1 // pred_region
      %84 = dma.done [#allocation4], 16
    $region49: #{tpu_custom_call.1} parent=1 // pred_fallthru
      _
    %85 = sfence
    %v86 = vld [vmem:[%s0] sm:$0xff]
    %v87 = vmul.f32 %v86, %v86
    %v88 = vld [vmem:[#allocation2] sm:$0xff]
    %v89 = vld [vmem:[#allocation2 + $0x8] sm:$0xff]
    %v90 = vld [vmem:[#allocation2 + $0x10] sm:$0xff]
    %v91 = vld [vmem:[#allocation2 + $0x18] sm:$0xff]
    %v92 = vld [vmem:[#allocation5] sm:$0xff]
    %v93 = vld [vmem:[#allocation5 + $0x8] sm:$0xff]
    %v94 = vld [vmem:[#allocation5 + $0x10] sm:$0xff]
    %v95 = vld [vmem:[#allocation5 + $0x18] sm:$0xff]
    %v100 = vcombine.high %v92, %v92
    %v102 = vunpack.c.l.s4 1983009808
    %v103 = vunpack.c.0.s8 %v102
    %v104 = vlaneseq
    %v105 = vshrl.u32 %v104, 7
    %v106 = vsub.s32 %v103, %v105
    %v107 = vrot.slane %v92, %v106
    %v109 = vunpack.c.l.s4 1983009808
    %v110 = vunpack.c.0.s8 %v109
    %v111 = vlaneseq
    %v112 = vshrl.u32 %v111, 7
    %v113 = vsub.s32 %v110, %v112
    %v114 = vrot.slane %v100, %v113
    %v115 = vcombine.high %v107, %v107
    %v116 = vcombine.high %v114, %v114
    %v117 = vcombine.high %v93, %v93
    %v119 = vunpack.c.l.s4 1983009808
    %v120 = vunpack.c.0.s8 %v119
    %v121 = vlaneseq
    %v122 = vshrl.u32 %v121, 7
    %v123 = vsub.s32 %v120, %v122
    %v124 = vrot.slane %v93, %v123
    %v126 = vunpack.c.l.s4 1983009808
    %v127 = vunpack.c.0.s8 %v126
    %v128 = vlaneseq
    %v129 = vshrl.u32 %v128, 7
    %v130 = vsub.s32 %v127, %v129
    %v131 = vrot.slane %v117, %v130
    %v132 = vcombine.high %v124, %v124
    %v133 = vcombine.high %v131, %v131
    %v134 = vcombine.high %v94, %v94
    %v136 = vunpack.c.l.s4 1983009808
    %v137 = vunpack.c.0.s8 %v136
    %v138 = vlaneseq
    %v139 = vshrl.u32 %v138, 7
    %v140 = vsub.s32 %v137, %v139
    %v141 = vrot.slane %v94, %v140
    %v143 = vunpack.c.l.s4 1983009808
    %v144 = vunpack.c.0.s8 %v143
    %v145 = vlaneseq
    %v146 = vshrl.u32 %v145, 7
    %v147 = vsub.s32 %v144, %v146
    %v148 = vrot.slane %v134, %v147
    %v149 = vcombine.high %v141, %v141
    %v150 = vcombine.high %v148, %v148
    %v151 = vcombine.high %v95, %v95
    %v153 = vunpack.c.l.s4 1983009808
    %v154 = vunpack.c.0.s8 %v153
    %v155 = vlaneseq
    %v156 = vshrl.u32 %v155, 7
    %v157 = vsub.s32 %v154, %v156
    %v158 = vrot.slane %v95, %v157
    %v160 = vunpack.c.l.s4 1983009808
    %v161 = vunpack.c.0.s8 %v160
    %v162 = vlaneseq
    %v163 = vshrl.u32 %v162, 7
    %v164 = vsub.s32 %v161, %v163
    %v165 = vrot.slane %v151, %v164
    %v166 = vcombine.high %v158, %v158
    %v167 = vcombine.high %v165, %v165
    %vm168 = vcmask 15360
    %v170 = vsel %vm168, %v86, 0
    %vm172 = vcmask 1041408
    %v173 = vsel %vm172, %v107, 0
    %v175 = vsel %vm172, %v115, 0
    %v177 = vsel %vm172, %v114, 0
    %v179 = vsel %vm172, %v116, 0
    %v181 = vsel %vm172, %v124, 0
    %v183 = vsel %vm172, %v132, 0
    %v185 = vsel %vm172, %v131, 0
    %v187 = vsel %vm172, %v133, 0
    %v189 = vsel %vm172, %v141, 0
    %v191 = vsel %vm172, %v149, 0
    %v193 = vsel %vm172, %v148, 0
    %v195 = vsel %vm172, %v150, 0
    %v197 = vsel %vm172, %v158, 0
    %v199 = vsel %vm172, %v166, 0
    %v201 = vsel %vm172, %v165, 0
    %v203 = vsel %vm172, %v167, 0
    %205 = vmatprep.subr.mxu0 %v175
    %206 = vmatpush1.msra.mxu0 %v173
    %207 = vmatprep.subr.mxu0 0.0
    %208 = vmatpush1.msra.mxu0 0.0
    %209 = vmatprep.subr.mxu0 0.0
    %210 = vmatpush1.msra.mxu0 0.0
    %211 = vmatprep.subr.mxu0 0.0
    %212 = vmatpush1.msra.mxu0 0.0
    %213 = vmatprep.subr.mxu0 0.0
    %214 = vmatpush1.msra.mxu0 0.0
    %215 = vmatprep.subr.mxu0 0.0
    %216 = vmatpush1.msra.mxu0 0.0
    %217 = vmatprep.subr.mxu0 0.0
    %218 = vmatpush1.msra.mxu0 0.0
    %219 = vmatprep.subr.mxu0 0.0
    %220 = vmatpush1.msra.mxu0 0.0
    %221 = vmatprep.subr.mxu0 0.0
    %222 = vmatpush1.msra.mxu0 0.0
    %223 = vmatprep.subr.mxu0 0.0
    %224 = vmatpush1.msra.mxu0 0.0
    %225 = vmatprep.subr.mxu0 0.0
    %226 = vmatpush1.msra.mxu0 0.0
    %227 = vmatprep.subr.mxu0 0.0
    %228 = vmatpush1.msra.mxu0 0.0
    %229 = vmatprep.subr.mxu0 0.0
    %230 = vmatpush1.msra.mxu0 0.0
    %231 = vmatprep.subr.mxu0 0.0
    %232 = vmatpush1.msra.mxu0 0.0
    %233 = vmatprep.subr.mxu0 0.0
    %234 = vmatpush1.msra.mxu0 0.0
    %235 = vmatprep.subr.mxu0 0.0
    %236 = vmatpush1.msra.mxu0 0.0
    %237 = vmatprep.subr.mxu0 0.0
    %238 = vmatpush1.msra.mxu0 0.0
    %239 = vmatprep.subr.mxu0 0.0
    %240 = vmatpush1.msra.mxu0 0.0
    %241 = vmatprep.subr.mxu0 0.0
    %242 = vmatpush1.msra.mxu0 0.0
    %243 = vmatprep.subr.mxu0 0.0
    %244 = vmatpush1.msra.mxu0 0.0
    %245 = vmatprep.subr.mxu0 0.0
    %246 = vmatpush1.msra.mxu0 0.0
    %247 = vmatprep.subr.mxu0 0.0
    %248 = vmatpush1.msra.mxu0 0.0
    %249 = vmatprep.subr.mxu0 0.0
    %250 = vmatpush1.msra.mxu0 0.0
    %251 = vmatprep.subr.mxu0 0.0
    %252 = vmatpush1.msra.mxu0 0.0
    %253 = vmatprep.subr.mxu0 0.0
    %254 = vmatpush1.msra.mxu0 0.0
    %255 = vmatprep.subr.mxu0 0.0
    %256 = vmatpush1.msra.mxu0 0.0
    %257 = vmatprep.subr.mxu0 0.0
    %258 = vmatpush1.msra.mxu0 0.0
    %259 = vmatprep.subr.mxu0 0.0
    %260 = vmatpush1.msra.mxu0 0.0
    %261 = vmatprep.subr.mxu0 0.0
    %262 = vmatpush1.msra.mxu0 0.0
    %263 = vmatprep.subr.mxu0 0.0
    %264 = vmatpush1.msra.mxu0 0.0
    %265 = vmatprep.subr.mxu0 0.0
    %266 = vmatpush1.msra.mxu0 0.0
    %267 = vmatprep.subr.mxu0 0.0
    %268 = vmatpush1.msra.mxu0 0.0
    %269 = vmatprep.mubr.f32.mxu0 0.0
    %270 = vmatmul.mubr.f32.gmra.mrb[0].mxu0 %v170
    %v271 = vpop.f32.mrb[0].mxu0
    %v272 = vadd.f32 0.0, %v271
    %v273 = vpop.f32.mrb[0].mxu0
    %v274 = vadd.f32 0.0, %v273
    %275 = vdwg.mxu0
    %276 = vmatprep.subr.mxu0 %v179
    %277 = vmatpush1.msra.mxu0 %v177
    %278 = vmatprep.subr.mxu0 0.0
    %279 = vmatpush1.msra.mxu0 0.0
    %280 = vmatprep.subr.mxu0 0.0
    %281 = vmatpush1.msra.mxu0 0.0
    %282 = vmatprep.subr.mxu0 0.0
    %283 = vmatpush1.msra.mxu0 0.0
    %284 = vmatprep.subr.mxu0 0.0
    %285 = vmatpush1.msra.mxu0 0.0
    %286 = vmatprep.subr.mxu0 0.0
    %287 = vmatpush1.msra.mxu0 0.0
    %288 = vmatprep.subr.mxu0 0.0
    %289 = vmatpush1.msra.mxu0 0.0
    %290 = vmatprep.subr.mxu0 0.0
    %291 = vmatpush1.msra.mxu0 0.0
    %292 = vmatprep.subr.mxu0 0.0
    %293 = vmatpush1.msra.mxu0 0.0
    %294 = vmatprep.subr.mxu0 0.0
    %295 = vmatpush1.msra.mxu0 0.0
    %296 = vmatprep.subr.mxu0 0.0
    %297 = vmatpush1.msra.mxu0 0.0
    %298 = vmatprep.subr.mxu0 0.0
    %299 = vmatpush1.msra.mxu0 0.0
    %300 = vmatprep.subr.mxu0 0.0
    %301 = vmatpush1.msra.mxu0 0.0
    %302 = vmatprep.subr.mxu0 0.0
    %303 = vmatpush1.msra.mxu0 0.0
    %304 = vmatprep.subr.mxu0 0.0
    %305 = vmatpush1.msra.mxu0 0.0
    %306 = vmatprep.subr.mxu0 0.0
    %307 = vmatpush1.msra.mxu0 0.0
    %308 = vmatprep.subr.mxu0 0.0
    %309 = vmatpush1.msra.mxu0 0.0
    %310 = vmatprep.subr.mxu0 0.0
    %311 = vmatpush1.msra.mxu0 0.0
    %312 = vmatprep.subr.mxu0 0.0
    %313 = vmatpush1.msra.mxu0 0.0
    %314 = vmatprep.subr.mxu0 0.0
    %315 = vmatpush1.msra.mxu0 0.0
    %316 = vmatprep.subr.mxu0 0.0
    %317 = vmatpush1.msra.mxu0 0.0
    %318 = vmatprep.subr.mxu0 0.0
    %319 = vmatpush1.msra.mxu0 0.0
    %320 = vmatprep.subr.mxu0 0.0
    %321 = vmatpush1.msra.mxu0 0.0
    %322 = vmatprep.subr.mxu0 0.0
    %323 = vmatpush1.msra.mxu0 0.0
    %324 = vmatprep.subr.mxu0 0.0
    %325 = vmatpush1.msra.mxu0 0.0
    %326 = vmatprep.subr.mxu0 0.0
    %327 = vmatpush1.msra.mxu0 0.0
    %328 = vmatprep.subr.mxu0 0.0
    %329 = vmatpush1.msra.mxu0 0.0
    %330 = vmatprep.subr.mxu0 0.0
    %331 = vmatpush1.msra.mxu0 0.0
    %332 = vmatprep.subr.mxu0 0.0
    %333 = vmatpush1.msra.mxu0 0.0
    %334 = vmatprep.subr.mxu0 0.0
    %335 = vmatpush1.msra.mxu0 0.0
    %336 = vmatprep.subr.mxu0 0.0
    %337 = vmatpush1.msra.mxu0 0.0
    %338 = vmatprep.subr.mxu0 0.0
    %339 = vmatpush1.msra.mxu0 0.0
    %340 = vmatprep.mubr.f32.mxu0 0.0
    %341 = vmatmul.mubr.f32.gmra.mrb[0].mxu0 %v170
    %v342 = vpop.f32.mrb[0].mxu0
    %v343 = vadd.f32 0.0, %v342
    %v344 = vpop.f32.mrb[0].mxu0
    %v345 = vadd.f32 0.0, %v344
    %346 = vdwg.mxu0
    %347 = vmatprep.subr.mxu0 %v183
    %348 = vmatpush1.msra.mxu0 %v181
    %349 = vmatprep.subr.mxu0 0.0
    %350 = vmatpush1.msra.mxu0 0.0
    %351 = vmatprep.subr.mxu0 0.0
    %352 = vmatpush1.msra.mxu0 0.0
    %353 = vmatprep.subr.mxu0 0.0
    %354 = vmatpush1.msra.mxu0 0.0
    %355 = vmatprep.subr.mxu0 0.0
    %356 = vmatpush1.msra.mxu0 0.0
    %357 = vmatprep.subr.mxu0 0.0
    %358 = vmatpush1.msra.mxu0 0.0
    %359 = vmatprep.subr.mxu0 0.0
    %360 = vmatpush1.msra.mxu0 0.0
    %361 = vmatprep.subr.mxu0 0.0
    %362 = vmatpush1.msra.mxu0 0.0
    %363 = vmatprep.subr.mxu0 0.0
    %364 = vmatpush1.msra.mxu0 0.0
    %365 = vmatprep.subr.mxu0 0.0
    %366 = vmatpush1.msra.mxu0 0.0
    %367 = vmatprep.subr.mxu0 0.0
    %368 = vmatpush1.msra.mxu0 0.0
    %369 = vmatprep.subr.mxu0 0.0
    %370 = vmatpush1.msra.mxu0 0.0
    %371 = vmatprep.subr.mxu0 0.0
    %372 = vmatpush1.msra.mxu0 0.0
    %373 = vmatprep.subr.mxu0 0.0
    %374 = vmatpush1.msra.mxu0 0.0
    %375 = vmatprep.subr.mxu0 0.0
    %376 = vmatpush1.msra.mxu0 0.0
    %377 = vmatprep.subr.mxu0 0.0
    %378 = vmatpush1.msra.mxu0 0.0
    %379 = vmatprep.subr.mxu0 0.0
    %380 = vmatpush1.msra.mxu0 0.0
    %381 = vmatprep.subr.mxu0 0.0
    %382 = vmatpush1.msra.mxu0 0.0
    %383 = vmatprep.subr.mxu0 0.0
    %384 = vmatpush1.msra.mxu0 0.0
    %385 = vmatprep.subr.mxu0 0.0
    %386 = vmatpush1.msra.mxu0 0.0
    %387 = vmatprep.subr.mxu0 0.0
    %388 = vmatpush1.msra.mxu0 0.0
    %389 = vmatprep.subr.mxu0 0.0
    %390 = vmatpush1.msra.mxu0 0.0
    %391 = vmatprep.subr.mxu0 0.0
    %392 = vmatpush1.msra.mxu0 0.0
    %393 = vmatprep.subr.mxu0 0.0
    %394 = vmatpush1.msra.mxu0 0.0
    %395 = vmatprep.subr.mxu0 0.0
    %396 = vmatpush1.msra.mxu0 0.0
    %397 = vmatprep.subr.mxu0 0.0
    %398 = vmatpush1.msra.mxu0 0.0
    %399 = vmatprep.subr.mxu0 0.0
    %400 = vmatpush1.msra.mxu0 0.0
    %401 = vmatprep.subr.mxu0 0.0
    %402 = vmatpush1.msra.mxu0 0.0
    %403 = vmatprep.subr.mxu0 0.0
    %404 = vmatpush1.msra.mxu0 0.0
    %405 = vmatprep.subr.mxu0 0.0
    %406 = vmatpush1.msra.mxu0 0.0
    %407 = vmatprep.subr.mxu0 0.0
    %408 = vmatpush1.msra.mxu0 0.0
    %409 = vmatprep.subr.mxu0 0.0
    %410 = vmatpush1.msra.mxu0 0.0
    %411 = vmatprep.mubr.f32.mxu0 0.0
    %412 = vmatmul.mubr.f32.gmra.mrb[0].mxu0 %v170
    %v413 = vpop.f32.mrb[0].mxu0
    %v414 = vadd.f32 0.0, %v413
    %v415 = vpop.f32.mrb[0].mxu0
    %v416 = vadd.f32 0.0, %v415
    %417 = vdwg.mxu0
    %418 = vmatprep.subr.mxu0 %v187
    %419 = vmatpush1.msra.mxu0 %v185
    %420 = vmatprep.subr.mxu0 0.0
    %421 = vmatpush1.msra.mxu0 0.0
    %422 = vmatprep.subr.mxu0 0.0
    %423 = vmatpush1.msra.mxu0 0.0
    %424 = vmatprep.subr.mxu0 0.0
    %425 = vmatpush1.msra.mxu0 0.0
    %426 = vmatprep.subr.mxu0 0.0
    %427 = vmatpush1.msra.mxu0 0.0
    %428 = vmatprep.subr.mxu0 0.0
    %429 = vmatpush1.msra.mxu0 0.0
    %430 = vmatprep.subr.mxu0 0.0
    %431 = vmatpush1.msra.mxu0 0.0
    %432 = vmatprep.subr.mxu0 0.0
    %433 = vmatpush1.msra.mxu0 0.0
    %434 = vmatprep.subr.mxu0 0.0
    %435 = vmatpush1.msra.mxu0 0.0
    %436 = vmatprep.subr.mxu0 0.0
    %437 = vmatpush1.msra.mxu0 0.0
    %438 = vmatprep.subr.mxu0 0.0
    %439 = vmatpush1.msra.mxu0 0.0
    %440 = vmatprep.subr.mxu0 0.0
    %441 = vmatpush1.msra.mxu0 0.0
    %442 = vmatprep.subr.mxu0 0.0
    %443 = vmatpush1.msra.mxu0 0.0
    %444 = vmatprep.subr.mxu0 0.0
    %445 = vmatpush1.msra.mxu0 0.0
    %446 = vmatprep.subr.mxu0 0.0
    %447 = vmatpush1.msra.mxu0 0.0
    %448 = vmatprep.subr.mxu0 0.0
    %449 = vmatpush1.msra.mxu0 0.0
    %450 = vmatprep.subr.mxu0 0.0
    %451 = vmatpush1.msra.mxu0 0.0
    %452 = vmatprep.subr.mxu0 0.0
    %453 = vmatpush1.msra.mxu0 0.0
    %454 = vmatprep.subr.mxu0 0.0
    %455 = vmatpush1.msra.mxu0 0.0
    %456 = vmatprep.subr.mxu0 0.0
    %457 = vmatpush1.msra.mxu0 0.0
    %458 = vmatprep.subr.mxu0 0.0
    %459 = vmatpush1.msra.mxu0 0.0
    %460 = vmatprep.subr.mxu0 0.0
    %461 = vmatpush1.msra.mxu0 0.0
    %462 = vmatprep.subr.mxu0 0.0
    %463 = vmatpush1.msra.mxu0 0.0
    %464 = vmatprep.subr.mxu0 0.0
    %465 = vmatpush1.msra.mxu0 0.0
    %466 = vmatprep.subr.mxu0 0.0
    %467 = vmatpush1.msra.mxu0 0.0
    %468 = vmatprep.subr.mxu0 0.0
    %469 = vmatpush1.msra.mxu0 0.0
    %470 = vmatprep.subr.mxu0 0.0
    %471 = vmatpush1.msra.mxu0 0.0
    %472 = vmatprep.subr.mxu0 0.0
    %473 = vmatpush1.msra.mxu0 0.0
    %474 = vmatprep.subr.mxu0 0.0
    %475 = vmatpush1.msra.mxu0 0.0
    %476 = vmatprep.subr.mxu0 0.0
    %477 = vmatpush1.msra.mxu0 0.0
    %478 = vmatprep.subr.mxu0 0.0
    %479 = vmatpush1.msra.mxu0 0.0
    %480 = vmatprep.subr.mxu0 0.0
    %481 = vmatpush1.msra.mxu0 0.0
    %482 = vmatprep.mubr.f32.mxu0 0.0
    %483 = vmatmul.mubr.f32.gmra.mrb[0].mxu0 %v170
    %v484 = vpop.f32.mrb[0].mxu0
    %v485 = vadd.f32 0.0, %v484
    %v486 = vpop.f32.mrb[0].mxu0
    %v487 = vadd.f32 0.0, %v486
    %488 = vdwg.mxu0
    %489 = vmatprep.subr.mxu0 %v191
    %490 = vmatpush1.msra.mxu0 %v189
    %491 = vmatprep.subr.mxu0 0.0
    %492 = vmatpush1.msra.mxu0 0.0
    %493 = vmatprep.subr.mxu0 0.0
    %494 = vmatpush1.msra.mxu0 0.0
    %495 = vmatprep.subr.mxu0 0.0
    %496 = vmatpush1.msra.mxu0 0.0
    %497 = vmatprep.subr.mxu0 0.0
    %498 = vmatpush1.msra.mxu0 0.0
    %499 = vmatprep.subr.mxu0 0.0
    %500 = vmatpush1.msra.mxu0 0.0
    %501 = vmatprep.subr.mxu0 0.0
    %502 = vmatpush1.msra.mxu0 0.0
    %503 = vmatprep.subr.mxu0 0.0
    %504 = vmatpush1.msra.mxu0 0.0
    %505 = vmatprep.subr.mxu0 0.0
    %506 = vmatpush1.msra.mxu0 0.0
    %507 = vmatprep.subr.mxu0 0.0
    %508 = vmatpush1.msra.mxu0 0.0
    %509 = vmatprep.subr.mxu0 0.0
    %510 = vmatpush1.msra.mxu0 0.0
    %511 = vmatprep.subr.mxu0 0.0
    %512 = vmatpush1.msra.mxu0 0.0
    %513 = vmatprep.subr.mxu0 0.0
    %514 = vmatpush1.msra.mxu0 0.0
    %515 = vmatprep.subr.mxu0 0.0
    %516 = vmatpush1.msra.mxu0 0.0
    %517 = vmatprep.subr.mxu0 0.0
    %518 = vmatpush1.msra.mxu0 0.0
    %519 = vmatprep.subr.mxu0 0.0
    %520 = vmatpush1.msra.mxu0 0.0
    %521 = vmatprep.subr.mxu0 0.0
    %522 = vmatpush1.msra.mxu0 0.0
    %523 = vmatprep.subr.mxu0 0.0
    %524 = vmatpush1.msra.mxu0 0.0
    %525 = vmatprep.subr.mxu0 0.0
    %526 = vmatpush1.msra.mxu0 0.0
    %527 = vmatprep.subr.mxu0 0.0
    %528 = vmatpush1.msra.mxu0 0.0
    %529 = vmatprep.subr.mxu0 0.0
    %530 = vmatpush1.msra.mxu0 0.0
    %531 = vmatprep.subr.mxu0 0.0
    %532 = vmatpush1.msra.mxu0 0.0
    %533 = vmatprep.subr.mxu0 0.0
    %534 = vmatpush1.msra.mxu0 0.0
    %535 = vmatprep.subr.mxu0 0.0
    %536 = vmatpush1.msra.mxu0 0.0
    %537 = vmatprep.subr.mxu0 0.0
    %538 = vmatpush1.msra.mxu0 0.0
    %539 = vmatprep.subr.mxu0 0.0
    %540 = vmatpush1.msra.mxu0 0.0
    %541 = vmatprep.subr.mxu0 0.0
    %542 = vmatpush1.msra.mxu0 0.0
    %543 = vmatprep.subr.mxu0 0.0
    %544 = vmatpush1.msra.mxu0 0.0
    %545 = vmatprep.subr.mxu0 0.0
    %546 = vmatpush1.msra.mxu0 0.0
    %547 = vmatprep.subr.mxu0 0.0
    %548 = vmatpush1.msra.mxu0 0.0
    %549 = vmatprep.subr.mxu0 0.0
    %550 = vmatpush1.msra.mxu0 0.0
    %551 = vmatprep.subr.mxu0 0.0
    %552 = vmatpush1.msra.mxu0 0.0
    %553 = vmatprep.mubr.f32.mxu0 0.0
    %554 = vmatmul.mubr.f32.gmra.mrb[0].mxu0 %v170
    %v555 = vpop.f32.mrb[0].mxu0
    %v556 = vadd.f32 0.0, %v555
    %v557 = vpop.f32.mrb[0].mxu0
    %v558 = vadd.f32 0.0, %v557
    %559 = vdwg.mxu0
    %560 = vmatprep.subr.mxu0 %v195
    %561 = vmatpush1.msra.mxu0 %v193
    %562 = vmatprep.subr.mxu0 0.0
    %563 = vmatpush1.msra.mxu0 0.0
    %564 = vmatprep.subr.mxu0 0.0
    %565 = vmatpush1.msra.mxu0 0.0
    %566 = vmatprep.subr.mxu0 0.0
    %567 = vmatpush1.msra.mxu0 0.0
    %568 = vmatprep.subr.mxu0 0.0
    %569 = vmatpush1.msra.mxu0 0.0
    %570 = vmatprep.subr.mxu0 0.0
    %571 = vmatpush1.msra.mxu0 0.0
    %572 = vmatprep.subr.mxu0 0.0
    %573 = vmatpush1.msra.mxu0 0.0
    %574 = vmatprep.subr.mxu0 0.0
    %575 = vmatpush1.msra.mxu0 0.0
    %576 = vmatprep.subr.mxu0 0.0
    %577 = vmatpush1.msra.mxu0 0.0
    %578 = vmatprep.subr.mxu0 0.0
    %579 = vmatpush1.msra.mxu0 0.0
    %580 = vmatprep.subr.mxu0 0.0
    %581 = vmatpush1.msra.mxu0 0.0
    %582 = vmatprep.subr.mxu0 0.0
    %583 = vmatpush1.msra.mxu0 0.0
    %584 = vmatprep.subr.mxu0 0.0
    %585 = vmatpush1.msra.mxu0 0.0
    %586 = vmatprep.subr.mxu0 0.0
    %587 = vmatpush1.msra.mxu0 0.0
    %588 = vmatprep.subr.mxu0 0.0
    %589 = vmatpush1.msra.mxu0 0.0
    %590 = vmatprep.subr.mxu0 0.0
    %591 = vmatpush1.msra.mxu0 0.0
    %592 = vmatprep.subr.mxu0 0.0
    %593 = vmatpush1.msra.mxu0 0.0
    %594 = vmatprep.subr.mxu0 0.0
    %595 = vmatpush1.msra.mxu0 0.0
    %596 = vmatprep.subr.mxu0 0.0
    %597 = vmatpush1.msra.mxu0 0.0
    %598 = vmatprep.subr.mxu0 0.0
    %599 = vmatpush1.msra.mxu0 0.0
    %600 = vmatprep.subr.mxu0 0.0
    %601 = vmatpush1.msra.mxu0 0.0
    %602 = vmatprep.subr.mxu0 0.0
    %603 = vmatpush1.msra.mxu0 0.0
    %604 = vmatprep.subr.mxu0 0.0
    %605 = vmatpush1.msra.mxu0 0.0
    %606 = vmatprep.subr.mxu0 0.0
    %607 = vmatpush1.msra.mxu0 0.0
    %608 = vmatprep.subr.mxu0 0.0
    %609 = vmatpush1.msra.mxu0 0.0
    %610 = vmatprep.subr.mxu0 0.0
    %611 = vmatpush1.msra.mxu0 0.0
    %612 = vmatprep.subr.mxu0 0.0
    %613 = vmatpush1.msra.mxu0 0.0
    %614 = vmatprep.subr.mxu0 0.0
    %615 = vmatpush1.msra.mxu0 0.0
    %616 = vmatprep.subr.mxu0 0.0
    %617 = vmatpush1.msra.mxu0 0.0
    %618 = vmatprep.subr.mxu0 0.0
    %619 = vmatpush1.msra.mxu0 0.0
    %620 = vmatprep.subr.mxu0 0.0
    %621 = vmatpush1.msra.mxu0 0.0
    %622 = vmatprep.subr.mxu0 0.0
    %623 = vmatpush1.msra.mxu0 0.0
    %624 = vmatprep.mubr.f32.mxu0 0.0
    %625 = vmatmul.mubr.f32.gmra.mrb[0].mxu0 %v170
    %v626 = vpop.f32.mrb[0].mxu0
    %v627 = vadd.f32 0.0, %v626
    %v628 = vpop.f32.mrb[0].mxu0
    %v629 = vadd.f32 0.0, %v628
    %630 = vdwg.mxu0
    %631 = vmatprep.subr.mxu0 %v199
    %632 = vmatpush1.msra.mxu0 %v197
    %633 = vmatprep.subr.mxu0 0.0
    %634 = vmatpush1.msra.mxu0 0.0
    %635 = vmatprep.subr.mxu0 0.0
    %636 = vmatpush1.msra.mxu0 0.0
    %637 = vmatprep.subr.mxu0 0.0
    %638 = vmatpush1.msra.mxu0 0.0
    %639 = vmatprep.subr.mxu0 0.0
    %640 = vmatpush1.msra.mxu0 0.0
    %641 = vmatprep.subr.mxu0 0.0
    %642 = vmatpush1.msra.mxu0 0.0
    %643 = vmatprep.subr.mxu0 0.0
    %644 = vmatpush1.msra.mxu0 0.0
    %645 = vmatprep.subr.mxu0 0.0
    %646 = vmatpush1.msra.mxu0 0.0
    %647 = vmatprep.subr.mxu0 0.0
    %648 = vmatpush1.msra.mxu0 0.0
    %649 = vmatprep.subr.mxu0 0.0
    %650 = vmatpush1.msra.mxu0 0.0
    %651 = vmatprep.subr.mxu0 0.0
    %652 = vmatpush1.msra.mxu0 0.0
    %653 = vmatprep.subr.mxu0 0.0
    %654 = vmatpush1.msra.mxu0 0.0
    %655 = vmatprep.subr.mxu0 0.0
    %656 = vmatpush1.msra.mxu0 0.0
    %657 = vmatprep.subr.mxu0 0.0
    %658 = vmatpush1.msra.mxu0 0.0
    %659 = vmatprep.subr.mxu0 0.0
    %660 = vmatpush1.msra.mxu0 0.0
    %661 = vmatprep.subr.mxu0 0.0
    %662 = vmatpush1.msra.mxu0 0.0
    %663 = vmatprep.subr.mxu0 0.0
    %664 = vmatpush1.msra.mxu0 0.0
    %665 = vmatprep.subr.mxu0 0.0
    %666 = vmatpush1.msra.mxu0 0.0
    %667 = vmatprep.subr.mxu0 0.0
    %668 = vmatpush1.msra.mxu0 0.0
    %669 = vmatprep.subr.mxu0 0.0
    %670 = vmatpush1.msra.mxu0 0.0
    %671 = vmatprep.subr.mxu0 0.0
    %672 = vmatpush1.msra.mxu0 0.0
    %673 = vmatprep.subr.mxu0 0.0
    %674 = vmatpush1.msra.mxu0 0.0
    %675 = vmatprep.subr.mxu0 0.0
    %676 = vmatpush1.msra.mxu0 0.0
    %677 = vmatprep.subr.mxu0 0.0
    %678 = vmatpush1.msra.mxu0 0.0
    %679 = vmatprep.subr.mxu0 0.0
    %680 = vmatpush1.msra.mxu0 0.0
    %681 = vmatprep.subr.mxu0 0.0
    %682 = vmatpush1.msra.mxu0 0.0
    %683 = vmatprep.subr.mxu0 0.0
    %684 = vmatpush1.msra.mxu0 0.0
    %685 = vmatprep.subr.mxu0 0.0
    %686 = vmatpush1.msra.mxu0 0.0
    %687 = vmatprep.subr.mxu0 0.0
    %688 = vmatpush1.msra.mxu0 0.0
    %689 = vmatprep.subr.mxu0 0.0
    %690 = vmatpush1.msra.mxu0 0.0
    %691 = vmatprep.subr.mxu0 0.0
    %692 = vmatpush1.msra.mxu0 0.0
    %693 = vmatprep.subr.mxu0 0.0
    %694 = vmatpush1.msra.mxu0 0.0
    %695 = vmatprep.mubr.f32.mxu0 0.0
    %696 = vmatmul.mubr.f32.gmra.mrb[0].mxu0 %v170
    %v697 = vpop.f32.mrb[0].mxu0
    %v698 = vadd.f32 0.0, %v697
    %v699 = vpop.f32.mrb[0].mxu0
    %v700 = vadd.f32 0.0, %v699
    %701 = vdwg.mxu0
    %702 = vmatprep.subr.mxu0 %v203
    %703 = vmatpush1.msra.mxu0 %v201
    %704 = vmatprep.subr.mxu0 0.0
    %705 = vmatpush1.msra.mxu0 0.0
    %706 = vmatprep.subr.mxu0 0.0
    %707 = vmatpush1.msra.mxu0 0.0
    %708 = vmatprep.subr.mxu0 0.0
    %709 = vmatpush1.msra.mxu0 0.0
    %710 = vmatprep.subr.mxu0 0.0
    %711 = vmatpush1.msra.mxu0 0.0
    %712 = vmatprep.subr.mxu0 0.0
    %713 = vmatpush1.msra.mxu0 0.0
    %714 = vmatprep.subr.mxu0 0.0
    %715 = vmatpush1.msra.mxu0 0.0
    %716 = vmatprep.subr.mxu0 0.0
    %717 = vmatpush1.msra.mxu0 0.0
    %718 = vmatprep.subr.mxu0 0.0
    %719 = vmatpush1.msra.mxu0 0.0
    %720 = vmatprep.subr.mxu0 0.0
    %721 = vmatpush1.msra.mxu0 0.0
    %722 = vmatprep.subr.mxu0 0.0
    %723 = vmatpush1.msra.mxu0 0.0
    %724 = vmatprep.subr.mxu0 0.0
    %725 = vmatpush1.msra.mxu0 0.0
    %726 = vmatprep.subr.mxu0 0.0
    %727 = vmatpush1.msra.mxu0 0.0
    %728 = vmatprep.subr.mxu0 0.0
    %729 = vmatpush1.msra.mxu0 0.0
    %730 = vmatprep.subr.mxu0 0.0
    %731 = vmatpush1.msra.mxu0 0.0
    %732 = vmatprep.subr.mxu0 0.0
    %733 = vmatpush1.msra.mxu0 0.0
    %734 = vmatprep.subr.mxu0 0.0
    %735 = vmatpush1.msra.mxu0 0.0
    %736 = vmatprep.subr.mxu0 0.0
    %737 = vmatpush1.msra.mxu0 0.0
    %738 = vmatprep.subr.mxu0 0.0
    %739 = vmatpush1.msra.mxu0 0.0
    %740 = vmatprep.subr.mxu0 0.0
    %741 = vmatpush1.msra.mxu0 0.0
    %742 = vmatprep.subr.mxu0 0.0
    %743 = vmatpush1.msra.mxu0 0.0
    %744 = vmatprep.subr.mxu0 0.0
    %745 = vmatpush1.msra.mxu0 0.0
    %746 = vmatprep.subr.mxu0 0.0
    %747 = vmatpush1.msra.mxu0 0.0
    %748 = vmatprep.subr.mxu0 0.0
    %749 = vmatpush1.msra.mxu0 0.0
    %750 = vmatprep.subr.mxu0 0.0
    %751 = vmatpush1.msra.mxu0 0.0
    %752 = vmatprep.subr.mxu0 0.0
    %753 = vmatpush1.msra.mxu0 0.0
    %754 = vmatprep.subr.mxu0 0.0
    %755 = vmatpush1.msra.mxu0 0.0
    %756 = vmatprep.subr.mxu0 0.0
    %757 = vmatpush1.msra.mxu0 0.0
    %758 = vmatprep.subr.mxu0 0.0
    %759 = vmatpush1.msra.mxu0 0.0
    %760 = vmatprep.subr.mxu0 0.0
    %761 = vmatpush1.msra.mxu0 0.0
    %762 = vmatprep.subr.mxu0 0.0
    %763 = vmatpush1.msra.mxu0 0.0
    %764 = vmatprep.subr.mxu0 0.0
    %765 = vmatpush1.msra.mxu0 0.0
    %766 = vmatprep.mubr.f32.mxu0 0.0
    %767 = vmatmul.mubr.f32.gmra.mrb[0].mxu0 %v170
    %v768 = vpop.f32.mrb[0].mxu0
    %v769 = vadd.f32 0.0, %v768
    %v770 = vpop.f32.mrb[0].mxu0
    %v771 = vadd.f32 0.0, %v770
    %772 = vdwg.mxu0
    %v777 = vcombine.high %v88, %v88
    %v779 = vunpack.c.l.s4 1983009808
    %v780 = vunpack.c.0.s8 %v779
    %v781 = vlaneseq
    %v782 = vshrl.u32 %v781, 7
    %v783 = vsub.s32 %v780, %v782
    %v784 = vrot.slane %v88, %v783
    %v786 = vunpack.c.l.s4 1983009808
    %v787 = vunpack.c.0.s8 %v786
    %v788 = vlaneseq
    %v789 = vshrl.u32 %v788, 7
    %v790 = vsub.s32 %v787, %v789
    %v791 = vrot.slane %v777, %v790
    %v792 = vcombine.high %v784, %v784
    %v793 = vcombine.high %v791, %v791
    %v794 = vcombine.high %v89, %v89
    %v796 = vunpack.c.l.s4 1983009808
    %v797 = vunpack.c.0.s8 %v796
    %v798 = vlaneseq
    %v799 = vshrl.u32 %v798, 7
    %v800 = vsub.s32 %v797, %v799
    %v801 = vrot.slane %v89, %v800
    %v803 = vunpack.c.l.s4 1983009808
    %v804 = vunpack.c.0.s8 %v803
    %v805 = vlaneseq
    %v806 = vshrl.u32 %v805, 7
    %v807 = vsub.s32 %v804, %v806
    %v808 = vrot.slane %v794, %v807
    %v809 = vcombine.high %v801, %v801
    %v810 = vcombine.high %v808, %v808
    %v811 = vcombine.high %v90, %v90
    %v813 = vunpack.c.l.s4 1983009808
    %v814 = vunpack.c.0.s8 %v813
    %v815 = vlaneseq
    %v816 = vshrl.u32 %v815, 7
    %v817 = vsub.s32 %v814, %v816
    %v818 = vrot.slane %v90, %v817
    %v820 = vunpack.c.l.s4 1983009808
    %v821 = vunpack.c.0.s8 %v820
    %v822 = vlaneseq
    %v823 = vshrl.u32 %v822, 7
    %v824 = vsub.s32 %v821, %v823
    %v825 = vrot.slane %v811, %v824
    %v826 = vcombine.high %v818, %v818
    %v827 = vcombine.high %v825, %v825
    %v828 = vcombine.high %v91, %v91
    %v830 = vunpack.c.l.s4 1983009808
    %v831 = vunpack.c.0.s8 %v830
    %v832 = vlaneseq
    %v833 = vshrl.u32 %v832, 7
    %v834 = vsub.s32 %v831, %v833
    %v835 = vrot.slane %v91, %v834
    %v837 = vunpack.c.l.s4 1983009808
    %v838 = vunpack.c.0.s8 %v837
    %v839 = vlaneseq
    %v840 = vshrl.u32 %v839, 7
    %v841 = vsub.s32 %v838, %v840
    %v842 = vrot.slane %v828, %v841
    %v843 = vcombine.high %v835, %v835
    %v844 = vcombine.high %v842, %v842
    %v846 = vsel %vm168, %v87, 0
    %v848 = vsel %vm172, %v784, 0
    %v850 = vsel %vm172, %v792, 0
    %v852 = vsel %vm172, %v791, 0
    %v854 = vsel %vm172, %v793, 0
    %v856 = vsel %vm172, %v801, 0
    %v858 = vsel %vm172, %v809, 0
    %v860 = vsel %vm172, %v808, 0
    %v862 = vsel %vm172, %v810, 0
    %v864 = vsel %vm172, %v818, 0
    %v866 = vsel %vm172, %v826, 0
    %v868 = vsel %vm172, %v825, 0
    %v870 = vsel %vm172, %v827, 0
    %v872 = vsel %vm172, %v835, 0
    %v874 = vsel %vm172, %v843, 0
    %v876 = vsel %vm172, %v842, 0
    %v878 = vsel %vm172, %v844, 0
    %880 = vmatprep.subr.mxu0 %v850
    %881 = vmatpush1.msra.mxu0 %v848
    %882 = vmatprep.subr.mxu0 0.0
    %883 = vmatpush1.msra.mxu0 0.0
    %884 = vmatprep.subr.mxu0 0.0
    %885 = vmatpush1.msra.mxu0 0.0
    %886 = vmatprep.subr.mxu0 0.0
    %887 = vmatpush1.msra.mxu0 0.0
    %888 = vmatprep.subr.mxu0 0.0
    %889 = vmatpush1.msra.mxu0 0.0
    %890 = vmatprep.subr.mxu0 0.0
    %891 = vmatpush1.msra.mxu0 0.0
    %892 = vmatprep.subr.mxu0 0.0
    %893 = vmatpush1.msra.mxu0 0.0
    %894 = vmatprep.subr.mxu0 0.0
    %895 = vmatpush1.msra.mxu0 0.0
    %896 = vmatprep.subr.mxu0 0.0
    %897 = vmatpush1.msra.mxu0 0.0
    %898 = vmatprep.subr.mxu0 0.0
    %899 = vmatpush1.msra.mxu0 0.0
    %900 = vmatprep.subr.mxu0 0.0
    %901 = vmatpush1.msra.mxu0 0.0
    %902 = vmatprep.subr.mxu0 0.0
    %903 = vmatpush1.msra.mxu0 0.0
    %904 = vmatprep.subr.mxu0 0.0
    %905 = vmatpush1.msra.mxu0 0.0
    %906 = vmatprep.subr.mxu0 0.0
    %907 = vmatpush1.msra.mxu0 0.0
    %908 = vmatprep.subr.mxu0 0.0
    %909 = vmatpush1.msra.mxu0 0.0
    %910 = vmatprep.subr.mxu0 0.0
    %911 = vmatpush1.msra.mxu0 0.0
    %912 = vmatprep.subr.mxu0 0.0
    %913 = vmatpush1.msra.mxu0 0.0
    %914 = vmatprep.subr.mxu0 0.0
    %915 = vmatpush1.msra.mxu0 0.0
    %916 = vmatprep.subr.mxu0 0.0
    %917 = vmatpush1.msra.mxu0 0.0
    %918 = vmatprep.subr.mxu0 0.0
    %919 = vmatpush1.msra.mxu0 0.0
    %920 = vmatprep.subr.mxu0 0.0
    %921 = vmatpush1.msra.mxu0 0.0
    %922 = vmatprep.subr.mxu0 0.0
    %923 = vmatpush1.msra.mxu0 0.0
    %924 = vmatprep.subr.mxu0 0.0
    %925 = vmatpush1.msra.mxu0 0.0
    %926 = vmatprep.subr.mxu0 0.0
    %927 = vmatpush1.msra.mxu0 0.0
    %928 = vmatprep.subr.mxu0 0.0
    %929 = vmatpush1.msra.mxu0 0.0
    %930 = vmatprep.subr.mxu0 0.0
    %931 = vmatpush1.msra.mxu0 0.0
    %932 = vmatprep.subr.mxu0 0.0
    %933 = vmatpush1.msra.mxu0 0.0
    %934 = vmatprep.subr.mxu0 0.0
    %935 = vmatpush1.msra.mxu0 0.0
    %936 = vmatprep.subr.mxu0 0.0
    %937 = vmatpush1.msra.mxu0 0.0
    %938 = vmatprep.subr.mxu0 0.0
    %939 = vmatpush1.msra.mxu0 0.0
    %940 = vmatprep.subr.mxu0 0.0
    %941 = vmatpush1.msra.mxu0 0.0
    %942 = vmatprep.subr.mxu0 0.0
    %943 = vmatpush1.msra.mxu0 0.0
    %944 = vmatprep.mubr.f32.mxu0 0.0
    %945 = vmatmul.mubr.f32.gmra.mrb[0].mxu0 %v846
    %v946 = vpop.f32.mrb[0].mxu0
    %v947 = vadd.f32 %v272, %v946
    %v948 = vpop.f32.mrb[0].mxu0
    %v949 = vadd.f32 %v274, %v948
    %950 = vdwg.mxu0
    %951 = vmatprep.subr.mxu0 %v854
    %952 = vmatpush1.msra.mxu0 %v852
    %953 = vmatprep.subr.mxu0 0.0
    %954 = vmatpush1.msra.mxu0 0.0
    %955 = vmatprep.subr.mxu0 0.0
    %956 = vmatpush1.msra.mxu0 0.0
    %957 = vmatprep.subr.mxu0 0.0
    %958 = vmatpush1.msra.mxu0 0.0
    %959 = vmatprep.subr.mxu0 0.0
    %960 = vmatpush1.msra.mxu0 0.0
    %961 = vmatprep.subr.mxu0 0.0
    %962 = vmatpush1.msra.mxu0 0.0
    %963 = vmatprep.subr.mxu0 0.0
    %964 = vmatpush1.msra.mxu0 0.0
    %965 = vmatprep.subr.mxu0 0.0
    %966 = vmatpush1.msra.mxu0 0.0
    %967 = vmatprep.subr.mxu0 0.0
    %968 = vmatpush1.msra.mxu0 0.0
    %969 = vmatprep.subr.mxu0 0.0
    %970 = vmatpush1.msra.mxu0 0.0
    %971 = vmatprep.subr.mxu0 0.0
    %972 = vmatpush1.msra.mxu0 0.0
    %973 = vmatprep.subr.mxu0 0.0
    %974 = vmatpush1.msra.mxu0 0.0
    %975 = vmatprep.subr.mxu0 0.0
    %976 = vmatpush1.msra.mxu0 0.0
    %977 = vmatprep.subr.mxu0 0.0
    %978 = vmatpush1.msra.mxu0 0.0
    %979 = vmatprep.subr.mxu0 0.0
    %980 = vmatpush1.msra.mxu0 0.0
    %981 = vmatprep.subr.mxu0 0.0
    %982 = vmatpush1.msra.mxu0 0.0
    %983 = vmatprep.subr.mxu0 0.0
    %984 = vmatpush1.msra.mxu0 0.0
    %985 = vmatprep.subr.mxu0 0.0
    %986 = vmatpush1.msra.mxu0 0.0
    %987 = vmatprep.subr.mxu0 0.0
    %988 = vmatpush1.msra.mxu0 0.0
    %989 = vmatprep.subr.mxu0 0.0
    %990 = vmatpush1.msra.mxu0 0.0
    %991 = vmatprep.subr.mxu0 0.0
    %992 = vmatpush1.msra.mxu0 0.0
    %993 = vmatprep.subr.mxu0 0.0
    %994 = vmatpush1.msra.mxu0 0.0
    %995 = vmatprep.subr.mxu0 0.0
    %996 = vmatpush1.msra.mxu0 0.0
    %997 = vmatprep.subr.mxu0 0.0
    %998 = vmatpush1.msra.mxu0 0.0
    %999 = vmatprep.subr.mxu0 0.0
    %1000 = vmatpush1.msra.mxu0 0.0
    %1001 = vmatprep.subr.mxu0 0.0
    %1002 = vmatpush1.msra.mxu0 0.0
    %1003 = vmatprep.subr.mxu0 0.0
    %1004 = vmatpush1.msra.mxu0 0.0
    %1005 = vmatprep.subr.mxu0 0.0
    %1006 = vmatpush1.msra.mxu0 0.0
    %1007 = vmatprep.subr.mxu0 0.0
    %1008 = vmatpush1.msra.mxu0 0.0
    %1009 = vmatprep.subr.mxu0 0.0
    %1010 = vmatpush1.msra.mxu0 0.0
    %1011 = vmatprep.subr.mxu0 0.0
    %1012 = vmatpush1.msra.mxu0 0.0
    %1013 = vmatprep.subr.mxu0 0.0
    %1014 = vmatpush1.msra.mxu0 0.0
    %1015 = vmatprep.mubr.f32.mxu0 0.0
    %1016 = vmatmul.mubr.f32.gmra.mrb[0].mxu0 %v846
    %v1017 = vpop.f32.mrb[0].mxu0
    %v1018 = vadd.f32 %v343, %v1017
    %v1019 = vpop.f32.mrb[0].mxu0
    %v1020 = vadd.f32 %v345, %v1019
    %1021 = vdwg.mxu0
    %1022 = vmatprep.subr.mxu0 %v858
    %1023 = vmatpush1.msra.mxu0 %v856
    %1024 = vmatprep.subr.mxu0 0.0
    %1025 = vmatpush1.msra.mxu0 0.0
    %1026 = vmatprep.subr.mxu0 0.0
    %1027 = vmatpush1.msra.mxu0 0.0
    %1028 = vmatprep.subr.mxu0 0.0
    %1029 = vmatpush1.msra.mxu0 0.0
    %1030 = vmatprep.subr.mxu0 0.0
    %1031 = vmatpush1.msra.mxu0 0.0
    %1032 = vmatprep.subr.mxu0 0.0
    %1033 = vmatpush1.msra.mxu0 0.0
    %1034 = vmatprep.subr.mxu0 0.0
    %1035 = vmatpush1.msra.mxu0 0.0
    %1036 = vmatprep.subr.mxu0 0.0
    %1037 = vmatpush1.msra.mxu0 0.0
    %1038 = vmatprep.subr.mxu0 0.0
    %1039 = vmatpush1.msra.mxu0 0.0
    %1040 = vmatprep.subr.mxu0 0.0
    %1041 = vmatpush1.msra.mxu0 0.0
    %1042 = vmatprep.subr.mxu0 0.0
    %1043 = vmatpush1.msra.mxu0 0.0
    %1044 = vmatprep.subr.mxu0 0.0
    %1045 = vmatpush1.msra.mxu0 0.0
    %1046 = vmatprep.subr.mxu0 0.0
    %1047 = vmatpush1.msra.mxu0 0.0
    %1048 = vmatprep.subr.mxu0 0.0
    %1049 = vmatpush1.msra.mxu0 0.0
    %1050 = vmatprep.subr.mxu0 0.0
    %1051 = vmatpush1.msra.mxu0 0.0
    %1052 = vmatprep.subr.mxu0 0.0
    %1053 = vmatpush1.msra.mxu0 0.0
    %1054 = vmatprep.subr.mxu0 0.0
    %1055 = vmatpush1.msra.mxu0 0.0
    %1056 = vmatprep.subr.mxu0 0.0
    %1057 = vmatpush1.msra.mxu0 0.0
    %1058 = vmatprep.subr.mxu0 0.0
    %1059 = vmatpush1.msra.mxu0 0.0
    %1060 = vmatprep.subr.mxu0 0.0
    %1061 = vmatpush1.msra.mxu0 0.0
    %1062 = vmatprep.subr.mxu0 0.0
    %1063 = vmatpush1.msra.mxu0 0.0
    %1064 = vmatprep.subr.mxu0 0.0
    %1065 = vmatpush1.msra.mxu0 0.0
    %1066 = vmatprep.subr.mxu0 0.0
    %1067 = vmatpush1.msra.mxu0 0.0
    %1068 = vmatprep.subr.mxu0 0.0
    %1069 = vmatpush1.msra.mxu0 0.0
    %1070 = vmatprep.subr.mxu0 0.0
    %1071 = vmatpush1.msra.mxu0 0.0
    %1072 = vmatprep.subr.mxu0 0.0
    %1073 = vmatpush1.msra.mxu0 0.0
    %1074 = vmatprep.subr.mxu0 0.0
    %1075 = vmatpush1.msra.mxu0 0.0
    %1076 = vmatprep.subr.mxu0 0.0
    %1077 = vmatpush1.msra.mxu0 0.0
    %1078 = vmatprep.subr.mxu0 0.0
    %1079 = vmatpush1.msra.mxu0 0.0
    %1080 = vmatprep.subr.mxu0 0.0
    %1081 = vmatpush1.msra.mxu0 0.0
    %1082 = vmatprep.subr.mxu0 0.0
    %1083 = vmatpush1.msra.mxu0 0.0
    %1084 = vmatprep.subr.mxu0 0.0
    %1085 = vmatpush1.msra.mxu0 0.0
    %1086 = vmatprep.mubr.f32.mxu0 0.0
    %1087 = vmatmul.mubr.f32.gmra.mrb[0].mxu0 %v846
    %v1088 = vpop.f32.mrb[0].mxu0
    %v1089 = vadd.f32 %v414, %v1088
    %v1090 = vpop.f32.mrb[0].mxu0
    %v1091 = vadd.f32 %v416, %v1090
    %1092 = vdwg.mxu0
    %1093 = vmatprep.subr.mxu0 %v862
    %1094 = vmatpush1.msra.mxu0 %v860
    %1095 = vmatprep.subr.mxu0 0.0
    %1096 = vmatpush1.msra.mxu0 0.0
    %1097 = vmatprep.subr.mxu0 0.0
    %1098 = vmatpush1.msra.mxu0 0.0
    %1099 = vmatprep.subr.mxu0 0.0
    %1100 = vmatpush1.msra.mxu0 0.0
    %1101 = vmatprep.subr.mxu0 0.0
    %1102 = vmatpush1.msra.mxu0 0.0
    %1103 = vmatprep.subr.mxu0 0.0
    %1104 = vmatpush1.msra.mxu0 0.0
    %1105 = vmatprep.subr.mxu0 0.0
    %1106 = vmatpush1.msra.mxu0 0.0
    %1107 = vmatprep.subr.mxu0 0.0
    %1108 = vmatpush1.msra.mxu0 0.0
    %1109 = vmatprep.subr.mxu0 0.0
    %1110 = vmatpush1.msra.mxu0 0.0
    %1111 = vmatprep.subr.mxu0 0.0
    %1112 = vmatpush1.msra.mxu0 0.0
    %1113 = vmatprep.subr.mxu0 0.0
    %1114 = vmatpush1.msra.mxu0 0.0
    %1115 = vmatprep.subr.mxu0 0.0
    %1116 = vmatpush1.msra.mxu0 0.0
    %1117 = vmatprep.subr.mxu0 0.0
    %1118 = vmatpush1.msra.mxu0 0.0
    %1119 = vmatprep.subr.mxu0 0.0
    %1120 = vmatpush1.msra.mxu0 0.0
    %1121 = vmatprep.subr.mxu0 0.0
    %1122 = vmatpush1.msra.mxu0 0.0
    %1123 = vmatprep.subr.mxu0 0.0
    %1124 = vmatpush1.msra.mxu0 0.0
    %1125 = vmatprep.subr.mxu0 0.0
    %1126 = vmatpush1.msra.mxu0 0.0
    %1127 = vmatprep.subr.mxu0 0.0
    %1128 = vmatpush1.msra.mxu0 0.0
    %1129 = vmatprep.subr.mxu0 0.0
    %1130 = vmatpush1.msra.mxu0 0.0
    %1131 = vmatprep.subr.mxu0 0.0
    %1132 = vmatpush1.msra.mxu0 0.0
    %1133 = vmatprep.subr.mxu0 0.0
    %1134 = vmatpush1.msra.mxu0 0.0
    %1135 = vmatprep.subr.mxu0 0.0
    %1136 = vmatpush1.msra.mxu0 0.0
    %1137 = vmatprep.subr.mxu0 0.0
    %1138 = vmatpush1.msra.mxu0 0.0
    %1139 = vmatprep.subr.mxu0 0.0
    %1140 = vmatpush1.msra.mxu0 0.0
    %1141 = vmatprep.subr.mxu0 0.0
    %1142 = vmatpush1.msra.mxu0 0.0
    %1143 = vmatprep.subr.mxu0 0.0
    %1144 = vmatpush1.msra.mxu0 0.0
    %1145 = vmatprep.subr.mxu0 0.0
    %1146 = vmatpush1.msra.mxu0 0.0
    %1147 = vmatprep.subr.mxu0 0.0
    %1148 = vmatpush1.msra.mxu0 0.0
    %1149 = vmatprep.subr.mxu0 0.0
    %1150 = vmatpush1.msra.mxu0 0.0
    %1151 = vmatprep.subr.mxu0 0.0
    %1152 = vmatpush1.msra.mxu0 0.0
    %1153 = vmatprep.subr.mxu0 0.0
    %1154 = vmatpush1.msra.mxu0 0.0
    %1155 = vmatprep.subr.mxu0 0.0
    %1156 = vmatpush1.msra.mxu0 0.0
    %1157 = vmatprep.mubr.f32.mxu0 0.0
    %1158 = vmatmul.mubr.f32.gmra.mrb[0].mxu0 %v846
    %v1159 = vpop.f32.mrb[0].mxu0
    %v1160 = vadd.f32 %v485, %v1159
    %v1161 = vpop.f32.mrb[0].mxu0
    %v1162 = vadd.f32 %v487, %v1161
    %1163 = vdwg.mxu0
    %1164 = vmatprep.subr.mxu0 %v866
    %1165 = vmatpush1.msra.mxu0 %v864
    %1166 = vmatprep.subr.mxu0 0.0
    %1167 = vmatpush1.msra.mxu0 0.0
    %1168 = vmatprep.subr.mxu0 0.0
    %1169 = vmatpush1.msra.mxu0 0.0
    %1170 = vmatprep.subr.mxu0 0.0
    %1171 = vmatpush1.msra.mxu0 0.0
    %1172 = vmatprep.subr.mxu0 0.0
    %1173 = vmatpush1.msra.mxu0 0.0
    %1174 = vmatprep.subr.mxu0 0.0
    %1175 = vmatpush1.msra.mxu0 0.0
    %1176 = vmatprep.subr.mxu0 0.0
    %1177 = vmatpush1.msra.mxu0 0.0
    %1178 = vmatprep.subr.mxu0 0.0
    %1179 = vmatpush1.msra.mxu0 0.0
    %1180 = vmatprep.subr.mxu0 0.0
    %1181 = vmatpush1.msra.mxu0 0.0
    %1182 = vmatprep.subr.mxu0 0.0
    %1183 = vmatpush1.msra.mxu0 0.0
    %1184 = vmatprep.subr.mxu0 0.0
    %1185 = vmatpush1.msra.mxu0 0.0
    %1186 = vmatprep.subr.mxu0 0.0
    %1187 = vmatpush1.msra.mxu0 0.0
    %1188 = vmatprep.subr.mxu0 0.0
    %1189 = vmatpush1.msra.mxu0 0.0
    %1190 = vmatprep.subr.mxu0 0.0
    %1191 = vmatpush1.msra.mxu0 0.0
    %1192 = vmatprep.subr.mxu0 0.0
    %1193 = vmatpush1.msra.mxu0 0.0
    %1194 = vmatprep.subr.mxu0 0.0
    %1195 = vmatpush1.msra.mxu0 0.0
    %1196 = vmatprep.subr.mxu0 0.0
    %1197 = vmatpush1.msra.mxu0 0.0
    %1198 = vmatprep.subr.mxu0 0.0
    %1199 = vmatpush1.msra.mxu0 0.0
    %1200 = vmatprep.subr.mxu0 0.0
    %1201 = vmatpush1.msra.mxu0 0.0
    %1202 = vmatprep.subr.mxu0 0.0
    %1203 = vmatpush1.msra.mxu0 0.0
    %1204 = vmatprep.subr.mxu0 0.0
    %1205 = vmatpush1.msra.mxu0 0.0
    %1206 = vmatprep.subr.mxu0 0.0
    %1207 = vmatpush1.msra.mxu0 0.0
    %1208 = vmatprep.subr.mxu0 0.0
    %1209 = vmatpush1.msra.mxu0 0.0
    %1210 = vmatprep.subr.mxu0 0.0
    %1211 = vmatpush1.msra.mxu0 0.0
    %1212 = vmatprep.subr.mxu0 0.0
    %1213 = vmatpush1.msra.mxu0 0.0
    %1214 = vmatprep.subr.mxu0 0.0
    %1215 = vmatpush1.msra.mxu0 0.0
    %1216 = vmatprep.subr.mxu0 0.0
    %1217 = vmatpush1.msra.mxu0 0.0
    %1218 = vmatprep.subr.mxu0 0.0
    %1219 = vmatpush1.msra.mxu0 0.0
    %1220 = vmatprep.subr.mxu0 0.0
    %1221 = vmatpush1.msra.mxu0 0.0
    %1222 = vmatprep.subr.mxu0 0.0
    %1223 = vmatpush1.msra.mxu0 0.0
    %1224 = vmatprep.subr.mxu0 0.0
    %1225 = vmatpush1.msra.mxu0 0.0
    %1226 = vmatprep.subr.mxu0 0.0
    %1227 = vmatpush1.msra.mxu0 0.0
    %1228 = vmatprep.mubr.f32.mxu0 0.0
    %1229 = vmatmul.mubr.f32.gmra.mrb[0].mxu0 %v846
    %v1230 = vpop.f32.mrb[0].mxu0
    %v1231 = vadd.f32 %v556, %v1230
    %v1232 = vpop.f32.mrb[0].mxu0
    %v1233 = vadd.f32 %v558, %v1232
    %1234 = vdwg.mxu0
    %1235 = vmatprep.subr.mxu0 %v870
    %1236 = vmatpush1.msra.mxu0 %v868
    %1237 = vmatprep.subr.mxu0 0.0
    %1238 = vmatpush1.msra.mxu0 0.0
    %1239 = vmatprep.subr.mxu0 0.0
    %1240 = vmatpush1.msra.mxu0 0.0
    %1241 = vmatprep.subr.mxu0 0.0
    %1242 = vmatpush1.msra.mxu0 0.0
    %1243 = vmatprep.subr.mxu0 0.0
    %1244 = vmatpush1.msra.mxu0 0.0
    %1245 = vmatprep.subr.mxu0 0.0
    %1246 = vmatpush1.msra.mxu0 0.0
    %1247 = vmatprep.subr.mxu0 0.0
    %1248 = vmatpush1.msra.mxu0 0.0
    %1249 = vmatprep.subr.mxu0 0.0
    %1250 = vmatpush1.msra.mxu0 0.0
    %1251 = vmatprep.subr.mxu0 0.0
    %1252 = vmatpush1.msra.mxu0 0.0
    %1253 = vmatprep.subr.mxu0 0.0
    %1254 = vmatpush1.msra.mxu0 0.0
    %1255 = vmatprep.subr.mxu0 0.0
    %1256 = vmatpush1.msra.mxu0 0.0
    %1257 = vmatprep.subr.mxu0 0.0
    %1258 = vmatpush1.msra.mxu0 0.0
    %1259 = vmatprep.subr.mxu0 0.0
    %1260 = vmatpush1.msra.mxu0 0.0
    %1261 = vmatprep.subr.mxu0 0.0
    %1262 = vmatpush1.msra.mxu0 0.0
    %1263 = vmatprep.subr.mxu0 0.0
    %1264 = vmatpush1.msra.mxu0 0.0
    %1265 = vmatprep.subr.mxu0 0.0
    %1266 = vmatpush1.msra.mxu0 0.0
    %1267 = vmatprep.subr.mxu0 0.0
    %1268 = vmatpush1.msra.mxu0 0.0
    %1269 = vmatprep.subr.mxu0 0.0
    %1270 = vmatpush1.msra.mxu0 0.0
    %1271 = vmatprep.subr.mxu0 0.0
    %1272 = vmatpush1.msra.mxu0 0.0
    %1273 = vmatprep.subr.mxu0 0.0
    %1274 = vmatpush1.msra.mxu0 0.0
    %1275 = vmatprep.subr.mxu0 0.0
    %1276 = vmatpush1.msra.mxu0 0.0
    %1277 = vmatprep.subr.mxu0 0.0
    %1278 = vmatpush1.msra.mxu0 0.0
    %1279 = vmatprep.subr.mxu0 0.0
    %1280 = vmatpush1.msra.mxu0 0.0
    %1281 = vmatprep.subr.mxu0 0.0
    %1282 = vmatpush1.msra.mxu0 0.0
    %1283 = vmatprep.subr.mxu0 0.0
    %1284 = vmatpush1.msra.mxu0 0.0
    %1285 = vmatprep.subr.mxu0 0.0
    %1286 = vmatpush1.msra.mxu0 0.0
    %1287 = vmatprep.subr.mxu0 0.0
    %1288 = vmatpush1.msra.mxu0 0.0
    %1289 = vmatprep.subr.mxu0 0.0
    %1290 = vmatpush1.msra.mxu0 0.0
    %1291 = vmatprep.subr.mxu0 0.0
    %1292 = vmatpush1.msra.mxu0 0.0
    %1293 = vmatprep.subr.mxu0 0.0
    %1294 = vmatpush1.msra.mxu0 0.0
    %1295 = vmatprep.subr.mxu0 0.0
    %1296 = vmatpush1.msra.mxu0 0.0
    %1297 = vmatprep.subr.mxu0 0.0
    %1298 = vmatpush1.msra.mxu0 0.0
    %1299 = vmatprep.mubr.f32.mxu0 0.0
    %1300 = vmatmul.mubr.f32.gmra.mrb[0].mxu0 %v846
    %v1301 = vpop.f32.mrb[0].mxu0
    %v1302 = vadd.f32 %v627, %v1301
    %v1303 = vpop.f32.mrb[0].mxu0
    %v1304 = vadd.f32 %v629, %v1303
    %1305 = vdwg.mxu0
    %1306 = vmatprep.subr.mxu0 %v874
    %1307 = vmatpush1.msra.mxu0 %v872
    %1308 = vmatprep.subr.mxu0 0.0
    %1309 = vmatpush1.msra.mxu0 0.0
    %1310 = vmatprep.subr.mxu0 0.0
    %1311 = vmatpush1.msra.mxu0 0.0
    %1312 = vmatprep.subr.mxu0 0.0
    %1313 = vmatpush1.msra.mxu0 0.0
    %1314 = vmatprep.subr.mxu0 0.0
    %1315 = vmatpush1.msra.mxu0 0.0
    %1316 = vmatprep.subr.mxu0 0.0
    %1317 = vmatpush1.msra.mxu0 0.0
    %1318 = vmatprep.subr.mxu0 0.0
    %1319 = vmatpush1.msra.mxu0 0.0
    %1320 = vmatprep.subr.mxu0 0.0
    %1321 = vmatpush1.msra.mxu0 0.0
    %1322 = vmatprep.subr.mxu0 0.0
    %1323 = vmatpush1.msra.mxu0 0.0
    %1324 = vmatprep.subr.mxu0 0.0
    %1325 = vmatpush1.msra.mxu0 0.0
    %1326 = vmatprep.subr.mxu0 0.0
    %1327 = vmatpush1.msra.mxu0 0.0
    %1328 = vmatprep.subr.mxu0 0.0
    %1329 = vmatpush1.msra.mxu0 0.0
    %1330 = vmatprep.subr.mxu0 0.0
    %1331 = vmatpush1.msra.mxu0 0.0
    %1332 = vmatprep.subr.mxu0 0.0
    %1333 = vmatpush1.msra.mxu0 0.0
    %1334 = vmatprep.subr.mxu0 0.0
    %1335 = vmatpush1.msra.mxu0 0.0
    %1336 = vmatprep.subr.mxu0 0.0
    %1337 = vmatpush1.msra.mxu0 0.0
    %1338 = vmatprep.subr.mxu0 0.0
    %1339 = vmatpush1.msra.mxu0 0.0
    %1340 = vmatprep.subr.mxu0 0.0
    %1341 = vmatpush1.msra.mxu0 0.0
    %1342 = vmatprep.subr.mxu0 0.0
    %1343 = vmatpush1.msra.mxu0 0.0
    %1344 = vmatprep.subr.mxu0 0.0
    %1345 = vmatpush1.msra.mxu0 0.0
    %1346 = vmatprep.subr.mxu0 0.0
    %1347 = vmatpush1.msra.mxu0 0.0
    %1348 = vmatprep.subr.mxu0 0.0
    %1349 = vmatpush1.msra.mxu0 0.0
    %1350 = vmatprep.subr.mxu0 0.0
    %1351 = vmatpush1.msra.mxu0 0.0
    %1352 = vmatprep.subr.mxu0 0.0
    %1353 = vmatpush1.msra.mxu0 0.0
    %1354 = vmatprep.subr.mxu0 0.0
    %1355 = vmatpush1.msra.mxu0 0.0
    %1356 = vmatprep.subr.mxu0 0.0
    %1357 = vmatpush1.msra.mxu0 0.0
    %1358 = vmatprep.subr.mxu0 0.0
    %1359 = vmatpush1.msra.mxu0 0.0
    %1360 = vmatprep.subr.mxu0 0.0
    %1361 = vmatpush1.msra.mxu0 0.0
    %1362 = vmatprep.subr.mxu0 0.0
    %1363 = vmatpush1.msra.mxu0 0.0
    %1364 = vmatprep.subr.mxu0 0.0
    %1365 = vmatpush1.msra.mxu0 0.0
    %1366 = vmatprep.subr.mxu0 0.0
    %1367 = vmatpush1.msra.mxu0 0.0
    %1368 = vmatprep.subr.mxu0 0.0
    %1369 = vmatpush1.msra.mxu0 0.0
    %1370 = vmatprep.mubr.f32.mxu0 0.0
    %1371 = vmatmul.mubr.f32.gmra.mrb[0].mxu0 %v846
    %v1372 = vpop.f32.mrb[0].mxu0
    %v1373 = vadd.f32 %v698, %v1372
    %v1374 = vpop.f32.mrb[0].mxu0
    %v1375 = vadd.f32 %v700, %v1374
    %1376 = vdwg.mxu0
    %1377 = vmatprep.subr.mxu0 %v878
    %1378 = vmatpush1.msra.mxu0 %v876
    %1379 = vmatprep.subr.mxu0 0.0
    %1380 = vmatpush1.msra.mxu0 0.0
    %1381 = vmatprep.subr.mxu0 0.0
    %1382 = vmatpush1.msra.mxu0 0.0
    %1383 = vmatprep.subr.mxu0 0.0
    %1384 = vmatpush1.msra.mxu0 0.0
    %1385 = vmatprep.subr.mxu0 0.0
    %1386 = vmatpush1.msra.mxu0 0.0
    %1387 = vmatprep.subr.mxu0 0.0
    %1388 = vmatpush1.msra.mxu0 0.0
    %1389 = vmatprep.subr.mxu0 0.0
    %1390 = vmatpush1.msra.mxu0 0.0
    %1391 = vmatprep.subr.mxu0 0.0
    %1392 = vmatpush1.msra.mxu0 0.0
    %1393 = vmatprep.subr.mxu0 0.0
    %1394 = vmatpush1.msra.mxu0 0.0
    %1395 = vmatprep.subr.mxu0 0.0
    %1396 = vmatpush1.msra.mxu0 0.0
    %1397 = vmatprep.subr.mxu0 0.0
    %1398 = vmatpush1.msra.mxu0 0.0
    %1399 = vmatprep.subr.mxu0 0.0
    %1400 = vmatpush1.msra.mxu0 0.0
    %1401 = vmatprep.subr.mxu0 0.0
    %1402 = vmatpush1.msra.mxu0 0.0
    %1403 = vmatprep.subr.mxu0 0.0
    %1404 = vmatpush1.msra.mxu0 0.0
    %1405 = vmatprep.subr.mxu0 0.0
    %1406 = vmatpush1.msra.mxu0 0.0
    %1407 = vmatprep.subr.mxu0 0.0
    %1408 = vmatpush1.msra.mxu0 0.0
    %1409 = vmatprep.subr.mxu0 0.0
    %1410 = vmatpush1.msra.mxu0 0.0
    %1411 = vmatprep.subr.mxu0 0.0
    %1412 = vmatpush1.msra.mxu0 0.0
    %1413 = vmatprep.subr.mxu0 0.0
    %1414 = vmatpush1.msra.mxu0 0.0
    %1415 = vmatprep.subr.mxu0 0.0
    %1416 = vmatpush1.msra.mxu0 0.0
    %1417 = vmatprep.subr.mxu0 0.0
    %1418 = vmatpush1.msra.mxu0 0.0
    %1419 = vmatprep.subr.mxu0 0.0
    %1420 = vmatpush1.msra.mxu0 0.0
    %1421 = vmatprep.subr.mxu0 0.0
    %1422 = vmatpush1.msra.mxu0 0.0
    %1423 = vmatprep.subr.mxu0 0.0
    %1424 = vmatpush1.msra.mxu0 0.0
    %1425 = vmatprep.subr.mxu0 0.0
    %1426 = vmatpush1.msra.mxu0 0.0
    %1427 = vmatprep.subr.mxu0 0.0
    %1428 = vmatpush1.msra.mxu0 0.0
    %1429 = vmatprep.subr.mxu0 0.0
    %1430 = vmatpush1.msra.mxu0 0.0
    %1431 = vmatprep.subr.mxu0 0.0
    %1432 = vmatpush1.msra.mxu0 0.0
    %1433 = vmatprep.subr.mxu0 0.0
    %1434 = vmatpush1.msra.mxu0 0.0
    %1435 = vmatprep.subr.mxu0 0.0
    %1436 = vmatpush1.msra.mxu0 0.0
    %1437 = vmatprep.subr.mxu0 0.0
    %1438 = vmatpush1.msra.mxu0 0.0
    %1439 = vmatprep.subr.mxu0 0.0
    %1440 = vmatpush1.msra.mxu0 0.0
    %1441 = vmatprep.mubr.f32.mxu0 0.0
    %1442 = vmatmul.mubr.f32.gmra.mrb[0].mxu0 %v846
    %v1443 = vpop.f32.mrb[0].mxu0
    %v1444 = vadd.f32 %v769, %v1443
    %v1445 = vpop.f32.mrb[0].mxu0
    %v1446 = vadd.f32 %v771, %v1445
    %1447 = vdwg.mxu0
    %v1448 = vld [vmem:[%s3] sm:$0xff]
    %v1449 = vld [vmem:[%s3 + $0x8] sm:$0xff]
    %v1452 = vlaneseq
    %v1453 = vshrl.u32 %v1452, 7
    %v1454 = vsub.s32 0, %v1453
    %v1455 = vrot.slane %v1448, %v1454
    %v1456 = vlaneseq
    %v1457 = vshrl.u32 %v1456, 7
    %v1458 = vsub.s32 1, %v1457
    %v1459 = vrot.slane %v1448, %v1458
    %v1460 = vlaneseq
    %v1461 = vshrl.u32 %v1460, 7
    %v1462 = vsub.s32 2, %v1461
    %v1463 = vrot.slane %v1448, %v1462
    %v1464 = vlaneseq
    %v1465 = vshrl.u32 %v1464, 7
    %v1466 = vsub.s32 3, %v1465
    %v1467 = vrot.slane %v1448, %v1466
    %v1468 = vlaneseq
    %v1469 = vshrl.u32 %v1468, 7
    %v1470 = vsub.s32 4, %v1469
    %v1471 = vrot.slane %v1448, %v1470
    %v1472 = vlaneseq
    %v1473 = vshrl.u32 %v1472, 7
    %v1474 = vsub.s32 5, %v1473
    %v1475 = vrot.slane %v1448, %v1474
    %v1476 = vlaneseq
    %v1477 = vshrl.u32 %v1476, 7
    %v1478 = vsub.s32 6, %v1477
    %v1479 = vrot.slane %v1448, %v1478
    %v1480 = vlaneseq
    %v1481 = vshrl.u32 %v1480, 7
    %v1482 = vsub.s32 7, %v1481
    %v1483 = vrot.slane %v1448, %v1482
    %v1484 = vlaneseq
    %v1485 = vshrl.u32 %v1484, 7
    %v1486 = vsub.s32 0, %v1485
    %v1487 = vrot.slane %v1449, %v1486
    %v1488 = vlaneseq
    %v1489 = vshrl.u32 %v1488, 7
    %v1490 = vsub.s32 1, %v1489
    %v1491 = vrot.slane %v1449, %v1490
    %v1492 = vlaneseq
    %v1493 = vshrl.u32 %v1492, 7
    %v1494 = vsub.s32 2, %v1493
    %v1495 = vrot.slane %v1449, %v1494
    %v1496 = vlaneseq
    %v1497 = vshrl.u32 %v1496, 7
    %v1498 = vsub.s32 3, %v1497
    %v1499 = vrot.slane %v1449, %v1498
    %v1500 = vlaneseq
    %v1501 = vshrl.u32 %v1500, 7
    %v1502 = vsub.s32 4, %v1501
    %v1503 = vrot.slane %v1449, %v1502
    %v1504 = vlaneseq
    %v1505 = vshrl.u32 %v1504, 7
    %v1506 = vsub.s32 5, %v1505
    %v1507 = vrot.slane %v1449, %v1506
    %v1508 = vlaneseq
    %v1509 = vshrl.u32 %v1508, 7
    %v1510 = vsub.s32 6, %v1509
    %v1511 = vrot.slane %v1449, %v1510
    %v1512 = vlaneseq
    %v1513 = vshrl.u32 %v1512, 7
    %v1514 = vsub.s32 7, %v1513
    %v1515 = vrot.slane %v1449, %v1514
    %v1532 = vadd.f32 %v947, %v1455
    %v1533 = vadd.f32 %v949, %v1459
    %v1534 = vadd.f32 %v1018, %v1463
    %v1535 = vadd.f32 %v1020, %v1467
    %v1536 = vadd.f32 %v1089, %v1471
    %v1537 = vadd.f32 %v1091, %v1475
    %v1538 = vadd.f32 %v1160, %v1479
    %v1539 = vadd.f32 %v1162, %v1483
    %v1540 = vadd.f32 %v1231, %v1487
    %v1541 = vadd.f32 %v1233, %v1491
    %v1542 = vadd.f32 %v1302, %v1495
    %v1543 = vadd.f32 %v1304, %v1499
    %v1544 = vadd.f32 %v1373, %v1503
    %v1545 = vadd.f32 %v1375, %v1507
    %v1546 = vadd.f32 %v1444, %v1511
    %v1547 = vadd.f32 %v1446, %v1515
    %v1548 = vtanh.pop %v1532
    %v1549 = vtanh.pop %v1533
    %v1550 = vtanh.pop %v1534
    %v1551 = vtanh.pop %v1535
    %v1552 = vtanh.pop %v1536
    %v1553 = vtanh.pop %v1537
    %v1554 = vtanh.pop %v1538
    %v1555 = vtanh.pop %v1539
    %v1556 = vtanh.pop %v1540
    %v1557 = vtanh.pop %v1541
    %v1558 = vtanh.pop %v1542
    %v1559 = vtanh.pop %v1543
    %v1560 = vtanh.pop %v1544
    %v1561 = vtanh.pop %v1545
    %v1562 = vtanh.pop %v1546
    %v1563 = vtanh.pop %v1547
    %v1564 = vmul.f32 %v1548, %v1548
    %v1565 = vmul.f32 %v1549, %v1549
    %v1566 = vmul.f32 %v1550, %v1550
    %v1567 = vmul.f32 %v1551, %v1551
    %v1568 = vmul.f32 %v1552, %v1552
    %v1569 = vmul.f32 %v1553, %v1553
    %v1570 = vmul.f32 %v1554, %v1554
    %v1571 = vmul.f32 %v1555, %v1555
    %v1572 = vmul.f32 %v1556, %v1556
    %v1573 = vmul.f32 %v1557, %v1557
    %v1574 = vmul.f32 %v1558, %v1558
    %v1575 = vmul.f32 %v1559, %v1559
    %v1576 = vmul.f32 %v1560, %v1560
    %v1577 = vmul.f32 %v1561, %v1561
    %v1578 = vmul.f32 %v1562, %v1562
    %v1579 = vmul.f32 %v1563, %v1563
    %v1580 = vld [vmem:[#allocation7] sm:$0xff]
    %v1581 = vld [vmem:[#allocation7 + $0x8] sm:$0xff]
    %v1584 = vlaneseq
    %v1585 = vshrl.u32 %v1584, 7
    %v1586 = vsub.s32 0, %v1585
    %v1587 = vrot.slane %v1580, %v1586
    %v1588 = vlaneseq
    %v1589 = vshrl.u32 %v1588, 7
    %v1590 = vsub.s32 1, %v1589
    %v1591 = vrot.slane %v1580, %v1590
    %v1592 = vlaneseq
    %v1593 = vshrl.u32 %v1592, 7
    %v1594 = vsub.s32 2, %v1593
    %v1595 = vrot.slane %v1580, %v1594
    %v1596 = vlaneseq
    %v1597 = vshrl.u32 %v1596, 7
    %v1598 = vsub.s32 3, %v1597
    %v1599 = vrot.slane %v1580, %v1598
    %v1600 = vlaneseq
    %v1601 = vshrl.u32 %v1600, 7
    %v1602 = vsub.s32 4, %v1601
    %v1603 = vrot.slane %v1580, %v1602
    %v1604 = vlaneseq
    %v1605 = vshrl.u32 %v1604, 7
    %v1606 = vsub.s32 5, %v1605
    %v1607 = vrot.slane %v1580, %v1606
    %v1608 = vlaneseq
    %v1609 = vshrl.u32 %v1608, 7
    %v1610 = vsub.s32 6, %v1609
    %v1611 = vrot.slane %v1580, %v1610
    %v1612 = vlaneseq
    %v1613 = vshrl.u32 %v1612, 7
    %v1614 = vsub.s32 7, %v1613
    %v1615 = vrot.slane %v1580, %v1614
    %v1616 = vlaneseq
    %v1617 = vshrl.u32 %v1616, 7
    %v1618 = vsub.s32 0, %v1617
    %v1619 = vrot.slane %v1581, %v1618
    %v1620 = vlaneseq
    %v1621 = vshrl.u32 %v1620, 7
    %v1622 = vsub.s32 1, %v1621
    %v1623 = vrot.slane %v1581, %v1622
    %v1624 = vlaneseq
    %v1625 = vshrl.u32 %v1624, 7
    %v1626 = vsub.s32 2, %v1625
    %v1627 = vrot.slane %v1581, %v1626
    %v1628 = vlaneseq
    %v1629 = vshrl.u32 %v1628, 7
    %v1630 = vsub.s32 3, %v1629
    %v1631 = vrot.slane %v1581, %v1630
    %v1632 = vlaneseq
    %v1633 = vshrl.u32 %v1632, 7
    %v1634 = vsub.s32 4, %v1633
    %v1635 = vrot.slane %v1581, %v1634
    %v1636 = vlaneseq
    %v1637 = vshrl.u32 %v1636, 7
    %v1638 = vsub.s32 5, %v1637
    %v1639 = vrot.slane %v1581, %v1638
    %v1640 = vlaneseq
    %v1641 = vshrl.u32 %v1640, 7
    %v1642 = vsub.s32 6, %v1641
    %v1643 = vrot.slane %v1581, %v1642
    %v1644 = vlaneseq
    %v1645 = vshrl.u32 %v1644, 7
    %v1646 = vsub.s32 7, %v1645
    %v1647 = vrot.slane %v1581, %v1646
    %v1664 = vmul.f32 %v1564, %v1587
    %v1665 = vmul.f32 %v1565, %v1591
    %v1666 = vmul.f32 %v1566, %v1595
    %v1667 = vmul.f32 %v1567, %v1599
    %v1668 = vmul.f32 %v1568, %v1603
    %v1669 = vmul.f32 %v1569, %v1607
    %v1670 = vmul.f32 %v1570, %v1611
    %v1671 = vmul.f32 %v1571, %v1615
    %v1672 = vmul.f32 %v1572, %v1619
    %v1673 = vmul.f32 %v1573, %v1623
    %v1674 = vmul.f32 %v1574, %v1627
    %v1675 = vmul.f32 %v1575, %v1631
    %v1676 = vmul.f32 %v1576, %v1635
    %v1677 = vmul.f32 %v1577, %v1639
    %v1678 = vmul.f32 %v1578, %v1643
    %v1679 = vmul.f32 %v1579, %v1647
    %v1680 = vld [vmem:[#allocation8] sm:$0xff]
    %v1681 = vld [vmem:[#allocation8 + $0x8] sm:$0xff]
    %v1684 = vlaneseq
    %v1685 = vshrl.u32 %v1684, 7
    %v1686 = vsub.s32 0, %v1685
    %v1687 = vrot.slane %v1680, %v1686
    %v1688 = vlaneseq
    %v1689 = vshrl.u32 %v1688, 7
    %v1690 = vsub.s32 1, %v1689
    %v1691 = vrot.slane %v1680, %v1690
    %v1692 = vlaneseq
    %v1693 = vshrl.u32 %v1692, 7
    %v1694 = vsub.s32 2, %v1693
    %v1695 = vrot.slane %v1680, %v1694
    %v1696 = vlaneseq
    %v1697 = vshrl.u32 %v1696, 7
    %v1698 = vsub.s32 3, %v1697
    %v1699 = vrot.slane %v1680, %v1698
    %v1700 = vlaneseq
    %v1701 = vshrl.u32 %v1700, 7
    %v1702 = vsub.s32 4, %v1701
    %v1703 = vrot.slane %v1680, %v1702
    %v1704 = vlaneseq
    %v1705 = vshrl.u32 %v1704, 7
    %v1706 = vsub.s32 5, %v1705
    %v1707 = vrot.slane %v1680, %v1706
    %v1708 = vlaneseq
    %v1709 = vshrl.u32 %v1708, 7
    %v1710 = vsub.s32 6, %v1709
    %v1711 = vrot.slane %v1680, %v1710
    %v1712 = vlaneseq
    %v1713 = vshrl.u32 %v1712, 7
    %v1714 = vsub.s32 7, %v1713
    %v1715 = vrot.slane %v1680, %v1714
    %v1716 = vlaneseq
    %v1717 = vshrl.u32 %v1716, 7
    %v1718 = vsub.s32 0, %v1717
    %v1719 = vrot.slane %v1681, %v1718
    %v1720 = vlaneseq
    %v1721 = vshrl.u32 %v1720, 7
    %v1722 = vsub.s32 1, %v1721
    %v1723 = vrot.slane %v1681, %v1722
    %v1724 = vlaneseq
    %v1725 = vshrl.u32 %v1724, 7
    %v1726 = vsub.s32 2, %v1725
    %v1727 = vrot.slane %v1681, %v1726
    %v1728 = vlaneseq
    %v1729 = vshrl.u32 %v1728, 7
    %v1730 = vsub.s32 3, %v1729
    %v1731 = vrot.slane %v1681, %v1730
    %v1732 = vlaneseq
    %v1733 = vshrl.u32 %v1732, 7
    %v1734 = vsub.s32 4, %v1733
    %v1735 = vrot.slane %v1681, %v1734
    %v1736 = vlaneseq
    %v1737 = vshrl.u32 %v1736, 7
    %v1738 = vsub.s32 5, %v1737
    %v1739 = vrot.slane %v1681, %v1738
    %v1740 = vlaneseq
    %v1741 = vshrl.u32 %v1740, 7
    %v1742 = vsub.s32 6, %v1741
    %v1743 = vrot.slane %v1681, %v1742
    %v1744 = vlaneseq
    %v1745 = vshrl.u32 %v1744, 7
    %v1746 = vsub.s32 7, %v1745
    %v1747 = vrot.slane %v1681, %v1746
    %v1764 = vmul.f32 %v1548, %v1687
    %v1765 = vmul.f32 %v1549, %v1691
    %v1766 = vmul.f32 %v1550, %v1695
    %v1767 = vmul.f32 %v1551, %v1699
    %v1768 = vmul.f32 %v1552, %v1703
    %v1769 = vmul.f32 %v1553, %v1707
    %v1770 = vmul.f32 %v1554, %v1711
    %v1771 = vmul.f32 %v1555, %v1715
    %v1772 = vmul.f32 %v1556, %v1719
    %v1773 = vmul.f32 %v1557, %v1723
    %v1774 = vmul.f32 %v1558, %v1727
    %v1775 = vmul.f32 %v1559, %v1731
    %v1776 = vmul.f32 %v1560, %v1735
    %v1777 = vmul.f32 %v1561, %v1739
    %v1778 = vmul.f32 %v1562, %v1743
    %v1779 = vmul.f32 %v1563, %v1747
    %v1780 = vadd.f32 %v1664, %v1764
    %v1781 = vadd.f32 %v1665, %v1765
    %v1782 = vadd.f32 %v1666, %v1766
    %v1783 = vadd.f32 %v1667, %v1767
    %v1784 = vadd.f32 %v1668, %v1768
    %v1785 = vadd.f32 %v1669, %v1769
    %v1786 = vadd.f32 %v1670, %v1770
    %v1787 = vadd.f32 %v1671, %v1771
    %v1788 = vadd.f32 %v1672, %v1772
    %v1789 = vadd.f32 %v1673, %v1773
    %v1790 = vadd.f32 %v1674, %v1774
    %v1791 = vadd.f32 %v1675, %v1775
    %v1792 = vadd.f32 %v1676, %v1776
    %v1793 = vadd.f32 %v1677, %v1777
    %v1794 = vadd.f32 %v1678, %v1778
    %v1795 = vadd.f32 %v1679, %v1779
    %v1796 = vadd.f32 %v1780, %v1781
    %v1797 = vadd.f32 %v1796, %v1782
    %v1798 = vadd.f32 %v1797, %v1783
    %1799 = vadd.xlane.f32.xlu0 %v1798
    %v1800 = vpop.xlane.xlu0 %1799
    %s1801 = sld [smem:[#allocation10]]
    %v1802 = vstv %s1801
    %v1803 = vadd.f32 %v1800, %v1802
    %v1804 = vadd.f32 %v1784, %v1785
    %v1805 = vadd.f32 %v1804, %v1786
    %v1806 = vadd.f32 %v1805, %v1787
    %1807 = vadd.xlane.f32.xlu0 %v1806
    %v1808 = vpop.xlane.xlu0 %1807
    %s1809 = sld [smem:[#allocation10 + $0x1]]
    %v1810 = vstv %s1809
    %v1811 = vadd.f32 %v1808, %v1810
    %v1812 = vadd.f32 %v1788, %v1789
    %v1813 = vadd.f32 %v1812, %v1790
    %v1814 = vadd.f32 %v1813, %v1791
    %1815 = vadd.xlane.f32.xlu0 %v1814
    %v1816 = vpop.xlane.xlu0 %1815
    %s1817 = sld [smem:[#allocation10 + $0x2]]
    %v1818 = vstv %s1817
    %v1819 = vadd.f32 %v1816, %v1818
    %v1820 = vadd.f32 %v1792, %v1793
    %v1821 = vadd.f32 %v1820, %v1794
    %v1822 = vadd.f32 %v1821, %v1795
    %1823 = vadd.xlane.f32.xlu0 %v1822
    %v1824 = vpop.xlane.xlu0 %1823
    %s1825 = sld [smem:[#allocation10 + $0x3]]
    %v1826 = vstv %s1825
    %v1827 = vadd.f32 %v1824, %v1826
    %v1828 = vmin.f32 %v1803, %v1811
    %v1829 = vmin.f32 %v1819, %v1827
    %v1830 = vmax.f32 %v1828, %v1829
    %vm1831 = vcmask 7168
    %1832 = vst.msk [vmem:[%s7] sm:$0xff] %vm1831, %v1830
    // Predicated region
    $region50: #{tpu_custom_call.1} parent=1 // pred_check
      _
    $region51: #{tpu_custom_call.1} parent=1 // pred_check_branch
      %1834 = sbr.rel (0) target = $region53
    $region52: #{tpu_custom_call.1} parent=1 // pred_region
      _
    $region53: #{tpu_custom_call.1} parent=1 // pred_fallthru
      _
    // Predicated region
    $region54: #{tpu_custom_call.1} parent=1 // pred_check
      _
    $region55: #{tpu_custom_call.1} parent=1 // pred_check_branch
      %1836 = sbr.rel (0) target = $region57
    $region56: #{tpu_custom_call.1} parent=1 // pred_region
      _
    $region57: #{tpu_custom_call.1} parent=1 // pred_fallthru
      _
    %1837 = vsyncpa [#allocation3], 1
    %1838 = vsyncpa [#allocation6], 1
    %1839 = vsyncpa [#allocation9], 1
    %1840 = vsyncpa [#allocation4], 1

</llo_original>
